<compile_context>
chip_gen: v6e
topology: v6e:2x2x1
jax: 0.10.0
libtpu: 0.0.40
codegen_flags: <defaults>
</compile_context>

<pallas_src>
import functools
import numpy as np
import jax
import jax.numpy as jnp
from jax.experimental import pallas as pl
from jax.experimental.pallas import tpu as pltpu

PAD_ROWS = 8  # sublane-aligned zero border on each side of the conv buffers


def set_conv_params(kernel_size):
    if kernel_size % 2 == 1:
        return 1, (kernel_size - 1) // 2
    return 2, kernel_size - 1


# ---------------------------------------------------------------------------
# Fused generator kernel
# ---------------------------------------------------------------------------
def _generator_kernel(z_ref, wfc_ref, bfc_ref,
                      w0_ref, b0_ref, w1_ref, b1_ref, w2_ref, b2_ref,
                      wl_ref, bl_ref,
                      o_ref,
                      pbuf0, pbuf1, pbuf2,
                      *, N, C, L0, L1, K, dilation, padding, slope):
    f32 = jnp.float32
    bf16 = jnp.bfloat16

    def leaky(x):                       # valid for 0 <= slope <= 1
        return jnp.maximum(x, slope * x)

    def zero_pad_rows(pbuf, L):
        zslab = jnp.zeros((N, padding, C), f32)
        pbuf[:, PAD_ROWS - padding:PAD_ROWS, :] = zslab
        pbuf[:, PAD_ROWS + L:PAD_ROWS + L + padding, :] = zslab

    def conv_same(pbuf, L, w_ref, b_ref):
        # im2col: K shifted views of the zero-edged NLC buffer concatenated on
        # the channel (lane) axis -> ONE [N*L, K*C] x [K*C, C] MXU matmul per
        # conv layer (bf16 operands, f32 accumulation), batch folded into rows.
        taps = []
        for k in range(K):
            off = PAD_ROWS + k * dilation - padding
            taps.append(pbuf[:, off:off + L, :])
        im2col = jnp.concatenate(taps, axis=-1).reshape(N * L, K * C)
        out = jnp.dot(im2col.astype(bf16), w_ref[...], preferred_element_type=f32)
        return out + b_ref[...]

    # ---- fc (first x2 nearest upsample folded into the packed fc weights) ----
    h = jnp.dot(z_ref[...].astype(bf16), wfc_ref[...], preferred_element_type=f32)
    h = h + bfc_ref[...]                                            # [N, L0*C]

    # single slab store of the fc output into the conv0 input buffer (NLC)
    zero_pad_rows(pbuf0, L0)
    pbuf0[:, PAD_ROWS:PAD_ROWS + L0, :] = h.reshape(N, L0, C)

    # ---- conv block 0 (spectral conv + LeakyReLU) ----------------------------
    out0 = leaky(conv_same(pbuf0, L0, w0_ref, b0_ref))              # [N*L0, C]

    # ---- x2 nearest upsample = plain row duplication (no matmul, no constant)
    up1 = jnp.repeat(out0, 2, axis=0)                               # [N*L1, C]
    zero_pad_rows(pbuf1, L1)
    pbuf1[:, PAD_ROWS:PAD_ROWS + L1, :] = up1.reshape(N, L1, C)

    # ---- conv block 1 ---------------------------------------------------------
    out1 = leaky(conv_same(pbuf1, L1, w1_ref, b1_ref))              # [N*L1, C]

    # ---- conv block 2 ---------------------------------------------------------
    zero_pad_rows(pbuf2, L1)
    pbuf2[:, PAD_ROWS:PAD_ROWS + L1, :] = out1.reshape(N, L1, C)
    out2 = leaky(conv_same(pbuf2, L1, w2_ref, b2_ref))              # [N*L1, C]

    # ---- last spectral 1x1 conv (Cout=1): VPU multiply + lane reduction ------
    act3 = out2.reshape(N, L1, C)
    y = jnp.sum(act3 * wl_ref[...], axis=-1) + bl_ref[...]          # [N, L1]
    o_ref[...] = y.astype(o_ref.dtype)


# ---------------------------------------------------------------------------
# Wrapper
# ---------------------------------------------------------------------------
def generator_forward(kp, z, *, channel_nb, init_size, kernel_size, relu_slope):
    dilation, padding = set_conv_params(kernel_size)
    assert padding <= PAD_ROWS
    N, D = z.shape
    C = channel_nb
    L0 = 2 * init_size          # length after the first (folded) upsample
    L1 = 4 * init_size          # length after the second upsample = output len
    Dp = kp["fc_w"].shape[0]    # zero-padded latent dim (multiple of 128)

    # zero-pad latent vectors to the padded contraction width (weight rows are 0)
    z_pad = jnp.pad(z.astype(jnp.float32), ((0, 0), (0, Dp - D)))

    kernel = functools.partial(
        _generator_kernel, N=N, C=C, L0=L0, L1=L1, K=kernel_size,
        dilation=dilation, padding=padding, slope=relu_slope)

    inputs = (z_pad, kp["fc_w"], kp["fc_b"],
              kp["conv0_w"], kp["conv0_b"],
              kp["conv1_w"], kp["conv1_b"],
              kp["conv2_w"], kp["conv2_b"],
              kp["last_w"], kp["last_b"])

    vmem = pl.BlockSpec(memory_space=pltpu.MemorySpace.VMEM)
    out = pl.pallas_call(
        kernel,
        out_shape=jax.ShapeDtypeStruct((N, L1), jnp.float32),
        in_specs=[vmem] * len(inputs),
        out_specs=vmem,
        scratch_shapes=[
            pltpu.VMEM((N, L0 + 2 * PAD_ROWS, C), jnp.float32),
            pltpu.VMEM((N, L1 + 2 * PAD_ROWS, C), jnp.float32),
            pltpu.VMEM((N, L1 + 2 * PAD_ROWS, C), jnp.float32),
        ],
    )(*inputs)
    # TODO(synk): only nb_features == 1 is emitted; >1 needs a [C, F] matmul
    # epilogue + per-feature store.
    # TODO(synk): for non-toy batches, add a batch grid axis with
    # dimension_semantics=("parallel",) so v7x's second TensorCore gets half.
    return out.reshape(N, 1, L1)                                    # NCL


# ---------------------------------------------------------------------------
# Parameter setup (deterministic, init-time only)
# ---------------------------------------------------------------------------
def spectral_normalize(w, key, n_iter=10, eps=1e-12):
    """Mimics torch spectral_norm: W / sigma, sigma via power iteration on
    W reshaped to [out_features, -1]."""
    wm = w.reshape(w.shape[0], -1).astype(jnp.float32)
    u = jax.random.normal(key, (wm.shape[0],), jnp.float32)
    u = u / (jnp.linalg.norm(u) + eps)
    v = None
    for _ in range(n_iter):
        v = wm.T @ u
        v = v / (jnp.linalg.norm(v) + eps)
        u = wm @ v
        u = u / (jnp.linalg.norm(u) + eps)
    sigma = jnp.dot(u, wm @ v)
    return (w / sigma).astype(w.dtype)


def init_generator_params(key, *, input_shape=(1, 48), latent_dim=100,
                          kernel_size=3, channel_nb=32):
    nb_features = input_shape[0]
    init_size = int(np.ceil(input_shape[1] / 4))
    keys = jax.random.split(key, 14)

    def unif(k, shape, fan_in):
        bound = 1.0 / float(np.sqrt(fan_in))
        return jax.random.uniform(k, shape, jnp.float32, -bound, bound)

    params = {}
    params["fc_w"] = unif(keys[0], (channel_nb * init_size, latent_dim), latent_dim)
    params["fc_b"] = unif(keys[1], (channel_nb * init_size,), latent_dim)
    fan_conv = channel_nb * kernel_size
    for i in range(3):
        w = unif(keys[2 + 2 * i], (channel_nb, channel_nb, kernel_size), fan_conv)
        b = unif(keys[3 + 2 * i], (channel_nb,), fan_conv)
        params[f"conv{i}_w"] = spectral_normalize(w, keys[8 + i])
        params[f"conv{i}_b"] = b
    w_last = unif(keys[11], (nb_features, channel_nb, 1), channel_nb)
    b_last = unif(keys[12], (nb_features,), channel_nb)
    params["last_w"] = spectral_normalize(w_last, keys[13])
    params["last_b"] = b_last
    return params, init_size


def pack_generator_params(params, *, latent_dim, channel_nb, init_size,
                          kernel_size):
    """One-time repacking of PyTorch-layout weights into kernel layout:
    NLC-friendly, first upsample + layout permutation folded into the fc
    weight, latent contraction padded to a multiple of 128, conv weights
    pre-packed for the fused im2col matmul, matmul weights stored bf16."""
    C, Li, D, K = channel_nb, init_size, latent_dim, kernel_size
    Dp = int(np.ceil(D / 128.0)) * 128

    # fc: column order t*C + c, with t -> l = t//2 (nearest upsample folded in)
    w = params["fc_w"].reshape(C, Li, D)           # [c, l, d]
    w = jnp.transpose(w, (1, 0, 2))                # [l, c, d]
    w = jnp.repeat(w, 2, axis=0)                   # [2*Li, c, d]
    w = w.reshape(2 * Li * C, D).T                 # [D, 2*Li*C]
    w = jnp.pad(w, ((0, Dp - D), (0, 0)))          # zero rows for padded latent
    b = params["fc_b"].reshape(C, Li).T            # [l, c]
    b = jnp.repeat(b, 2, axis=0).reshape(1, 2 * Li * C)

    kp = {"fc_w": w.astype(jnp.bfloat16), "fc_b": b.astype(jnp.float32)}
    for i in range(3):
        # torch [Cout, Cin, K] -> im2col-packed [K*Cin, Cout]
        wc = jnp.transpose(params[f"conv{i}_w"], (2, 1, 0)).reshape(K * C, C)
        kp[f"conv{i}_w"] = wc.astype(jnp.bfloat16)
        kp[f"conv{i}_b"] = params[f"conv{i}_b"].reshape(1, C).astype(jnp.float32)
    kp["last_w"] = params["last_w"][:, :, 0].astype(jnp.float32)   # [1, C]
    kp["last_b"] = params["last_b"].reshape(1, 1).astype(jnp.float32)
    return kp


# ---------------------------------------------------------------------------
if __name__ == "__main__":
    key = jax.random.PRNGKey(0)
    k_params, k_z = jax.random.split(key)

    INPUT_SHAPE = (1, 48)
    LATENT_DIM = 100
    KERNEL_SIZE = 3
    CHANNEL_NB = 32
    RELU_SLOPE = 0.2
    BATCH = 2

    params, init_size = init_generator_params(
        k_params, input_shape=INPUT_SHAPE, latent_dim=LATENT_DIM,
        kernel_size=KERNEL_SIZE, channel_nb=CHANNEL_NB)
    packed = pack_generator_params(
        params, latent_dim=LATENT_DIM, channel_nb=CHANNEL_NB,
        init_size=init_size, kernel_size=KERNEL_SIZE)

    z = jax.random.normal(k_z, (BATCH, LATENT_DIM), jnp.float32)

    fwd = jax.jit(functools.partial(
        generator_forward, channel_nb=CHANNEL_NB, init_size=init_size,
        kernel_size=KERNEL_SIZE, relu_slope=RELU_SLOPE))
    x = jax.block_until_ready(fwd(packed, z))

    assert x.shape == (BATCH, INPUT_SHAPE[0], INPUT_SHAPE[1]), x.shape
    assert bool(jnp.all(jnp.isfinite(x)))
    print("KERNEL_OK")
</pallas_src>

<mosaic_0001>
module attributes {stable_mosaic.version = 11 : i64} {
  func.func @_generator_kernel(%arg0: memref<2x128xf32, #tpu.memory_space<vmem>>, %arg1: memref<128x768xbf16, #tpu.memory_space<vmem>>, %arg2: memref<1x768xf32, #tpu.memory_space<vmem>>, %arg3: memref<96x32xbf16, #tpu.memory_space<vmem>>, %arg4: memref<1x32xf32, #tpu.memory_space<vmem>>, %arg5: memref<96x32xbf16, #tpu.memory_space<vmem>>, %arg6: memref<1x32xf32, #tpu.memory_space<vmem>>, %arg7: memref<96x32xbf16, #tpu.memory_space<vmem>>, %arg8: memref<1x32xf32, #tpu.memory_space<vmem>>, %arg9: memref<1x32xf32, #tpu.memory_space<vmem>>, %arg10: memref<1x1xf32, #tpu.memory_space<vmem>>, %arg11: memref<2x48xf32, #tpu.memory_space<vmem>>, %arg12: memref<2x40x32xf32, #tpu.memory_space<vmem>>, %arg13: memref<2x64x32xf32, #tpu.memory_space<vmem>>, %arg14: memref<2x64x32xf32, #tpu.memory_space<vmem>>) attributes {dimension_semantics = [], scalar_prefetch = 0 : i64, scratch_operands = 3 : i64, tpu.core_type = #tpu.core_type<tc>} {
    %c0 = arith.constant 0 : index
    %c0_0 = arith.constant 0 : index
    %0 = vector.load %arg0[%c0, %c0_0] : memref<2x128xf32, #tpu.memory_space<vmem>>, vector<2x128xf32>
    %1 = arith.truncf %0 : vector<2x128xf32> to vector<2x128xbf16>
    %c0_1 = arith.constant 0 : index
    %c0_2 = arith.constant 0 : index
    %2 = vector.load %arg1[%c0_1, %c0_2] : memref<128x768xbf16, #tpu.memory_space<vmem>>, vector<128x768xbf16>
    %cst = arith.constant dense<0.000000e+00> : vector<2x768xf32>
    %3 = tpu.matmul %1, %2, %cst {dimension_numbers = #tpu.dot_dimension_numbers<[1], [0], [0], [1], [0, 0, 1, 1], [], []>} : vector<2x128xbf16>, vector<128x768xbf16>, vector<2x768xf32> -> vector<2x768xf32>
    %c0_3 = arith.constant 0 : index
    %c0_4 = arith.constant 0 : index
    %4 = vector.load %arg2[%c0_3, %c0_4] : memref<1x768xf32, #tpu.memory_space<vmem>>, vector<1x768xf32>
    %5 = vector.broadcast %4 : vector<1x768xf32> to vector<2x768xf32>
    %6 = arith.addf %3, %5 : vector<2x768xf32>
    %cst_5 = arith.constant 0.000000e+00 : f32
    %7 = vector.broadcast %cst_5 : f32 to vector<2x1x32xf32>
    %c0_6 = arith.constant 0 : index
    %c7 = arith.constant 7 : index
    %c0_7 = arith.constant 0 : index
    %8 = vector.load %arg12[%c0_6, %c7, %c0_7] : memref<2x40x32xf32, #tpu.memory_space<vmem>>, vector<2x1x32xf32>
    tpu.vector_store %arg12[%c0_6, %c7, %c0_7], %7 {strides = array<i32>} : memref<2x40x32xf32, #tpu.memory_space<vmem>>, vector<2x1x32xf32>,
    %c0_8 = arith.constant 0 : index
    %c32 = arith.constant 32 : index
    %c0_9 = arith.constant 0 : index
    %9 = vector.load %arg12[%c0_8, %c32, %c0_9] : memref<2x40x32xf32, #tpu.memory_space<vmem>>, vector<2x1x32xf32>
    tpu.vector_store %arg12[%c0_8, %c32, %c0_9], %7 {strides = array<i32>} : memref<2x40x32xf32, #tpu.memory_space<vmem>>, vector<2x1x32xf32>,
    %10 = vector.shape_cast %6 : vector<2x768xf32> to vector<2x24x32xf32>
    %c0_10 = arith.constant 0 : index
    %c8 = arith.constant 8 : index
    %c0_11 = arith.constant 0 : index
    %11 = vector.load %arg12[%c0_10, %c8, %c0_11] : memref<2x40x32xf32, #tpu.memory_space<vmem>>, vector<2x24x32xf32>
    tpu.vector_store %arg12[%c0_10, %c8, %c0_11], %10 {strides = array<i32>} : memref<2x40x32xf32, #tpu.memory_space<vmem>>, vector<2x24x32xf32>,
    %c0_12 = arith.constant 0 : index
    %c7_13 = arith.constant 7 : index
    %c0_14 = arith.constant 0 : index
    %12 = vector.load %arg12[%c0_12, %c7_13, %c0_14] : memref<2x40x32xf32, #tpu.memory_space<vmem>>, vector<2x24x32xf32>
    %c0_15 = arith.constant 0 : index
    %c8_16 = arith.constant 8 : index
    %c0_17 = arith.constant 0 : index
    %13 = vector.load %arg12[%c0_15, %c8_16, %c0_17] : memref<2x40x32xf32, #tpu.memory_space<vmem>>, vector<2x24x32xf32>
    %c0_18 = arith.constant 0 : index
    %c9 = arith.constant 9 : index
    %c0_19 = arith.constant 0 : index
    %14 = vector.load %arg12[%c0_18, %c9, %c0_19] : memref<2x40x32xf32, #tpu.memory_space<vmem>>, vector<2x24x32xf32>
    %15 = tpu.concatenate %12, %13, %14 in 2 : vector<2x24x32xf32>, vector<2x24x32xf32>, vector<2x24x32xf32> -> vector<2x24x96xf32>
    %16 = vector.shape_cast %15 : vector<2x24x96xf32> to vector<48x96xf32>
    %17 = arith.truncf %16 : vector<48x96xf32> to vector<48x96xbf16>
    %c0_20 = arith.constant 0 : index
    %c0_21 = arith.constant 0 : index
    %18 = vector.load %arg3[%c0_20, %c0_21] : memref<96x32xbf16, #tpu.memory_space<vmem>>, vector<96x32xbf16>
    %cst_22 = arith.constant dense<0.000000e+00> : vector<48x32xf32>
    %19 = tpu.matmul %17, %18, %cst_22 {dimension_numbers = #tpu.dot_dimension_numbers<[1], [0], [0], [1], [0, 0, 1, 1], [], []>} : vector<48x96xbf16>, vector<96x32xbf16>, vector<48x32xf32> -> vector<48x32xf32>
    %c0_23 = arith.constant 0 : index
    %c0_24 = arith.constant 0 : index
    %20 = vector.load %arg4[%c0_23, %c0_24] : memref<1x32xf32, #tpu.memory_space<vmem>>, vector<1x32xf32>
    %21 = vector.broadcast %20 : vector<1x32xf32> to vector<48x32xf32>
    %22 = arith.addf %19, %21 : vector<48x32xf32>
    %cst_25 = arith.constant 2.000000e-01 : f32
    %23 = vector.broadcast %cst_25 : f32 to vector<48x32xf32>
    %24 = arith.mulf %23, %22 : vector<48x32xf32>
    %25 = arith.maximumf %22, %24 : vector<48x32xf32>
    %26 = vector.shape_cast %25 : vector<48x32xf32> to vector<48x1x32xf32>
    %27 = vector.broadcast %26 : vector<48x1x32xf32> to vector<48x2x32xf32>
    %28 = vector.shape_cast %27 : vector<48x2x32xf32> to vector<96x32xf32>
    %cst_26 = arith.constant 0.000000e+00 : f32
    %29 = vector.broadcast %cst_26 : f32 to vector<2x1x32xf32>
    %c0_27 = arith.constant 0 : index
    %c7_28 = arith.constant 7 : index
    %c0_29 = arith.constant 0 : index
    %30 = vector.load %arg13[%c0_27, %c7_28, %c0_29] : memref<2x64x32xf32, #tpu.memory_space<vmem>>, vector<2x1x32xf32>
    tpu.vector_store %arg13[%c0_27, %c7_28, %c0_29], %29 {strides = array<i32>} : memref<2x64x32xf32, #tpu.memory_space<vmem>>, vector<2x1x32xf32>,
    %c0_30 = arith.constant 0 : index
    %c56 = arith.constant 56 : index
    %c0_31 = arith.constant 0 : index
    %31 = vector.load %arg13[%c0_30, %c56, %c0_31] : memref<2x64x32xf32, #tpu.memory_space<vmem>>, vector<2x1x32xf32>
    tpu.vector_store %arg13[%c0_30, %c56, %c0_31], %29 {strides = array<i32>} : memref<2x64x32xf32, #tpu.memory_space<vmem>>, vector<2x1x32xf32>,
    %32 = vector.shape_cast %28 : vector<96x32xf32> to vector<2x48x32xf32>
    %c0_32 = arith.constant 0 : index
    %c8_33 = arith.constant 8 : index
    %c0_34 = arith.constant 0 : index
    %33 = vector.load %arg13[%c0_32, %c8_33, %c0_34] : memref<2x64x32xf32, #tpu.memory_space<vmem>>, vector<2x48x32xf32>
    tpu.vector_store %arg13[%c0_32, %c8_33, %c0_34], %32 {strides = array<i32>} : memref<2x64x32xf32, #tpu.memory_space<vmem>>, vector<2x48x32xf32>,
    %c0_35 = arith.constant 0 : index
    %c7_36 = arith.constant 7 : index
    %c0_37 = arith.constant 0 : index
    %34 = vector.load %arg13[%c0_35, %c7_36, %c0_37] : memref<2x64x32xf32, #tpu.memory_space<vmem>>, vector<2x48x32xf32>
    %c0_38 = arith.constant 0 : index
    %c8_39 = arith.constant 8 : index
    %c0_40 = arith.constant 0 : index
    %35 = vector.load %arg13[%c0_38, %c8_39, %c0_40] : memref<2x64x32xf32, #tpu.memory_space<vmem>>, vector<2x48x32xf32>
    %c0_41 = arith.constant 0 : index
    %c9_42 = arith.constant 9 : index
    %c0_43 = arith.constant 0 : index
    %36 = vector.load %arg13[%c0_41, %c9_42, %c0_43] : memref<2x64x32xf32, #tpu.memory_space<vmem>>, vector<2x48x32xf32>
    %37 = tpu.concatenate %34, %35, %36 in 2 : vector<2x48x32xf32>, vector<2x48x32xf32>, vector<2x48x32xf32> -> vector<2x48x96xf32>
    %38 = vector.shape_cast %37 : vector<2x48x96xf32> to vector<96x96xf32>
    %39 = arith.truncf %38 : vector<96x96xf32> to vector<96x96xbf16>
    %c0_44 = arith.constant 0 : index
    %c0_45 = arith.constant 0 : index
    %40 = vector.load %arg5[%c0_44, %c0_45] : memref<96x32xbf16, #tpu.memory_space<vmem>>, vector<96x32xbf16>
    %cst_46 = arith.constant dense<0.000000e+00> : vector<96x32xf32>
    %41 = tpu.matmul %39, %40, %cst_46 {dimension_numbers = #tpu.dot_dimension_numbers<[1], [0], [0], [1], [0, 0, 1, 1], [], []>} : vector<96x96xbf16>, vector<96x32xbf16>, vector<96x32xf32> -> vector<96x32xf32>
    %c0_47 = arith.constant 0 : index
    %c0_48 = arith.constant 0 : index
    %42 = vector.load %arg6[%c0_47, %c0_48] : memref<1x32xf32, #tpu.memory_space<vmem>>, vector<1x32xf32>
    %43 = vector.broadcast %42 : vector<1x32xf32> to vector<96x32xf32>
    %44 = arith.addf %41, %43 : vector<96x32xf32>
    %cst_49 = arith.constant 2.000000e-01 : f32
    %45 = vector.broadcast %cst_49 : f32 to vector<96x32xf32>
    %46 = arith.mulf %45, %44 : vector<96x32xf32>
    %47 = arith.maximumf %44, %46 : vector<96x32xf32>
    %cst_50 = arith.constant 0.000000e+00 : f32
    %48 = vector.broadcast %cst_50 : f32 to vector<2x1x32xf32>
    %c0_51 = arith.constant 0 : index
    %c7_52 = arith.constant 7 : index
    %c0_53 = arith.constant 0 : index
    %49 = vector.load %arg14[%c0_51, %c7_52, %c0_53] : memref<2x64x32xf32, #tpu.memory_space<vmem>>, vector<2x1x32xf32>
    tpu.vector_store %arg14[%c0_51, %c7_52, %c0_53], %48 {strides = array<i32>} : memref<2x64x32xf32, #tpu.memory_space<vmem>>, vector<2x1x32xf32>,
    %c0_54 = arith.constant 0 : index
    %c56_55 = arith.constant 56 : index
    %c0_56 = arith.constant 0 : index
    %50 = vector.load %arg14[%c0_54, %c56_55, %c0_56] : memref<2x64x32xf32, #tpu.memory_space<vmem>>, vector<2x1x32xf32>
    tpu.vector_store %arg14[%c0_54, %c56_55, %c0_56], %48 {strides = array<i32>} : memref<2x64x32xf32, #tpu.memory_space<vmem>>, vector<2x1x32xf32>,
    %51 = vector.shape_cast %47 : vector<96x32xf32> to vector<2x48x32xf32>
    %c0_57 = arith.constant 0 : index
    %c8_58 = arith.constant 8 : index
    %c0_59 = arith.constant 0 : index
    %52 = vector.load %arg14[%c0_57, %c8_58, %c0_59] : memref<2x64x32xf32, #tpu.memory_space<vmem>>, vector<2x48x32xf32>
    tpu.vector_store %arg14[%c0_57, %c8_58, %c0_59], %51 {strides = array<i32>} : memref<2x64x32xf32, #tpu.memory_space<vmem>>, vector<2x48x32xf32>,
    %c0_60 = arith.constant 0 : index
    %c7_61 = arith.constant 7 : index
    %c0_62 = arith.constant 0 : index
    %53 = vector.load %arg14[%c0_60, %c7_61, %c0_62] : memref<2x64x32xf32, #tpu.memory_space<vmem>>, vector<2x48x32xf32>
    %c0_63 = arith.constant 0 : index
    %c8_64 = arith.constant 8 : index
    %c0_65 = arith.constant 0 : index
    %54 = vector.load %arg14[%c0_63, %c8_64, %c0_65] : memref<2x64x32xf32, #tpu.memory_space<vmem>>, vector<2x48x32xf32>
    %c0_66 = arith.constant 0 : index
    %c9_67 = arith.constant 9 : index
    %c0_68 = arith.constant 0 : index
    %55 = vector.load %arg14[%c0_66, %c9_67, %c0_68] : memref<2x64x32xf32, #tpu.memory_space<vmem>>, vector<2x48x32xf32>
    %56 = tpu.concatenate %53, %54, %55 in 2 : vector<2x48x32xf32>, vector<2x48x32xf32>, vector<2x48x32xf32> -> vector<2x48x96xf32>
    %57 = vector.shape_cast %56 : vector<2x48x96xf32> to vector<96x96xf32>
    %58 = arith.truncf %57 : vector<96x96xf32> to vector<96x96xbf16>
    %c0_69 = arith.constant 0 : index
    %c0_70 = arith.constant 0 : index
    %59 = vector.load %arg7[%c0_69, %c0_70] : memref<96x32xbf16, #tpu.memory_space<vmem>>, vector<96x32xbf16>
    %cst_71 = arith.constant dense<0.000000e+00> : vector<96x32xf32>
    %60 = tpu.matmul %58, %59, %cst_71 {dimension_numbers = #tpu.dot_dimension_numbers<[1], [0], [0], [1], [0, 0, 1, 1], [], []>} : vector<96x96xbf16>, vector<96x32xbf16>, vector<96x32xf32> -> vector<96x32xf32>
    %c0_72 = arith.constant 0 : index
    %c0_73 = arith.constant 0 : index
    %61 = vector.load %arg8[%c0_72, %c0_73] : memref<1x32xf32, #tpu.memory_space<vmem>>, vector<1x32xf32>
    %62 = vector.broadcast %61 : vector<1x32xf32> to vector<96x32xf32>
    %63 = arith.addf %60, %62 : vector<96x32xf32>
    %cst_74 = arith.constant 2.000000e-01 : f32
    %64 = vector.broadcast %cst_74 : f32 to vector<96x32xf32>
    %65 = arith.mulf %64, %63 : vector<96x32xf32>
    %66 = arith.maximumf %63, %65 : vector<96x32xf32>
    %67 = vector.shape_cast %66 : vector<96x32xf32> to vector<2x48x32xf32>
    %c0_75 = arith.constant 0 : index
    %c0_76 = arith.constant 0 : index
    %68 = vector.load %arg9[%c0_75, %c0_76] : memref<1x32xf32, #tpu.memory_space<vmem>>, vector<1x32xf32>
    %69 = vector.shape_cast %68 : vector<1x32xf32> to vector<1x1x32xf32>
    %70 = vector.broadcast %69 : vector<1x1x32xf32> to vector<2x48x32xf32>
    %71 = arith.mulf %67, %70 : vector<2x48x32xf32>
    %cst_77 = arith.constant dense<0.000000e+00> : vector<2x48xf32>
    %72 = vector.multi_reduction <add>, %71, %cst_77 [2] : vector<2x48x32xf32> to vector<2x48xf32>
    %c0_78 = arith.constant 0 : index
    %c0_79 = arith.constant 0 : index
    %73 = vector.load %arg10[%c0_78, %c0_79] : memref<1x1xf32, #tpu.memory_space<vmem>>, vector<1x1xf32>
    %74 = vector.broadcast %73 : vector<1x1xf32> to vector<2x48xf32>
    %75 = arith.addf %72, %74 : vector<2x48xf32>
    %c0_80 = arith.constant 0 : index
    %c0_81 = arith.constant 0 : index
    %76 = vector.load %arg11[%c0_80, %c0_81] : memref<2x48xf32, #tpu.memory_space<vmem>>, vector<2x48xf32>
    tpu.vector_store %arg11[%c0_80, %c0_81], %75 {strides = array<i32>} : memref<2x48xf32, #tpu.memory_space<vmem>>, vector<2x48xf32>,
    return
  }
}

</mosaic_0001>

<llo_original>
// kernel: generator_forward.1
$region0: #{generator_forward.1}
  #allocation0 [shape = 'u32[]', space=smem, size = 0x4, offset = 0x4, fixed_abs, tag = 'smem constant byte address 0x4 - core index']
  #allocation1 [shape = 'u32[144,128]{1,0:T(1,128)}', space=vmem, size = 0x12000, scoped, tag = 'internal scratch']
  #allocation2 [shape = 'f32[2,40,32]{2,1,0:T(8,128)}', space=vmem, size = 0xa000, scoped, tag = 'scratch operand']
  #allocation3 [shape = 'f32[2,64,32]{2,1,0:T(8,128)}', space=vmem, size = 0x10000, scoped, tag = 'scratch operand']
  #allocation4 [shape = 'f32[2,64,32]{2,1,0:T(8,128)}', space=vmem, size = 0x10000, scoped, tag = 'scratch operand']
  #allocation5 [shape = 'f32[1,1]{1,0:T(1,128)S(1)}', space=vmem, size = 0x200, scoped, tag = 'scoped memory for generator_forward.1']
  %s0 = inlined_call_operand.vmem [shape: f32[2,128], index: 0, kind: input, shape index: {}]
  %s1 = inlined_call_operand.hbm [shape: bf16[128,768], index: 1, kind: input, shape index: {}]
  %s2 = inlined_call_operand.vmem [shape: f32[1,768], index: 2, kind: input, shape index: {}]
  %s3 = inlined_call_operand.vmem [shape: bf16[96,32], index: 3, kind: input, shape index: {}]
  %s4 = inlined_call_operand.vmem [shape: f32[1,32], index: 4, kind: input, shape index: {}]
  %s5 = inlined_call_operand.vmem [shape: bf16[96,32], index: 5, kind: input, shape index: {}]
  %s6 = inlined_call_operand.vmem [shape: f32[1,32], index: 6, kind: input, shape index: {}]
  %s7 = inlined_call_operand.vmem [shape: bf16[96,32], index: 7, kind: input, shape index: {}]
  %s8 = inlined_call_operand.vmem [shape: f32[1,32], index: 8, kind: input, shape index: {}]
  %s9 = inlined_call_operand.vmem [shape: f32[1,32], index: 9, kind: input, shape index: {}]
  %s10 = inlined_call_operand.<no memory space> [shape: f32[1,1], index: 10, kind: input, shape index: {}]
  %s11 = inlined_call_operand.hbm [shape: f32[2,48], index: 11, kind: output, shape index: {}]
  %s12 = sld [smem:[#allocation0]]
  $region58: #{generator_forward.1} parent=0
    _
  %s14 = ssub.s32 1, %s12
  %s15 = scalar_select 0, %s14, %s12
  %v16 = vstv %s10
  %17 = vst [vmem:[#allocation5] sm:$0x1] %v16
  $region1: #{generator_forward.1} parent=0
    #allocation6 [shape = 'u8[196608]{0}', space=vmem, size = 0x30000, scoped, tag = 'input window, operand 1, single buffered']
    #allocation7 [shape = 's32[1]{0}', space=sflag, size = 0x4, scoped, tag = 'scoped memory for generator_forward.1']
    #allocation8 [shape = 's32[1]{0}', space=sflag, size = 0x4, scoped, tag = 'scoped memory for generator_forward.1']
    #allocation9 [shape = 'u8[1024]{0}', space=vmem, size = 0x400, scoped, tag = 'output window, operand 0, single buffered']
    %18 = vsyncpa [#allocation7], 0
    %19 = vsyncpa [#allocation8], 0
    // Predicated region
    $region2: #{generator_forward.1} parent=1 // pred_check
      _
    $region3: #{generator_forward.1} parent=1 // pred_check_branch
      %21 = sbr.rel (0) target = $region5
    $region4: #{generator_forward.1} parent=1 // pred_region
      _
    $region5: #{generator_forward.1} parent=1 // pred_fallthru
      _
    // Predicated region
    $region6: #{generator_forward.1} parent=1 // pred_check
      _
    $region7: #{generator_forward.1} parent=1 // pred_check_branch
      %23 = sbr.rel (0) target = $region9
    $region8: #{generator_forward.1} parent=1 // pred_region
      %s25 = ssub.s32 6144, 6144
      %26 = vsyncadd [#allocation7], %s25
      %s27 = sshll.u32 [#allocation6], 4
      %s28 = int_to_ptr.vmem [resolvable:$true] %s27
      %33 = dma.hbm_to_vmem [thread:$0]  %s1, 6144, %s28, [#allocation7], 384, 384, 24
    $region9: #{generator_forward.1} parent=1 // pred_fallthru
      _
    // Predicated region
    $region10: #{generator_forward.1} parent=1 // pred_check
      _
    $region11: #{generator_forward.1} parent=1 // pred_check_branch
      %35 = sbr.rel (0) target = $region13
    $region12: #{generator_forward.1} parent=1 // pred_region
      _
    $region13: #{generator_forward.1} parent=1 // pred_fallthru
      _
    // Predicated region
    $region14: #{generator_forward.1} parent=1 // pred_check
      _
    $region15: #{generator_forward.1} parent=1 // pred_check_branch
      %37 = sbr.rel (0) target = $region17
    $region16: #{generator_forward.1} parent=1 // pred_region
      _
    $region17: #{generator_forward.1} parent=1 // pred_fallthru
      _
    // Predicated region
    $region18: #{generator_forward.1} parent=1 // pred_check
      _
    $region19: #{generator_forward.1} parent=1 // pred_check_branch
      %39 = sbr.rel (0) target = $region21
    $region20: #{generator_forward.1} parent=1 // pred_region
      _
    $region21: #{generator_forward.1} parent=1 // pred_fallthru
      _
    // Predicated region
    $region22: #{generator_forward.1} parent=1 // pred_check
      _
    $region23: #{generator_forward.1} parent=1 // pred_check_branch
      %41 = sbr.rel (0) target = $region25
    $region24: #{generator_forward.1} parent=1 // pred_region
      _
    $region25: #{generator_forward.1} parent=1 // pred_fallthru
      _
    // Predicated region
    $region26: #{generator_forward.1} parent=1 // pred_check
      _
    $region27: #{generator_forward.1} parent=1 // pred_check_branch
      %43 = sbr.rel (0) target = $region29
    $region28: #{generator_forward.1} parent=1 // pred_region
      _
    $region29: #{generator_forward.1} parent=1 // pred_fallthru
      _
    // Predicated region
    $region30: #{generator_forward.1} parent=1 // pred_check
      _
    $region31: #{generator_forward.1} parent=1 // pred_check_branch
      %45 = sbr.rel (0) target = $region33
    $region32: #{generator_forward.1} parent=1 // pred_region
      _
    $region33: #{generator_forward.1} parent=1 // pred_fallthru
      _
    // Predicated region
    $region34: #{generator_forward.1} parent=1 // pred_check
      _
    $region35: #{generator_forward.1} parent=1 // pred_check_branch
      %47 = sbr.rel (0) target = $region37
    $region36: #{generator_forward.1} parent=1 // pred_region
      _
    $region37: #{generator_forward.1} parent=1 // pred_fallthru
      _
    // Predicated region
    $region38: #{generator_forward.1} parent=1 // pred_check
      _
    $region39: #{generator_forward.1} parent=1 // pred_check_branch
      %49 = sbr.rel (0) target = $region41
    $region40: #{generator_forward.1} parent=1 // pred_region
      _
    $region41: #{generator_forward.1} parent=1 // pred_fallthru
      _
    // Predicated region
    $region42: #{generator_forward.1} parent=1 // pred_check
      _
    $region43: #{generator_forward.1} parent=1 // pred_check_branch
      %51 = sbr.rel (0) target = $region45
    $region44: #{generator_forward.1} parent=1 // pred_region
      _
    $region45: #{generator_forward.1} parent=1 // pred_fallthru
      _
    // Predicated region
    $region46: #{generator_forward.1} parent=1 // pred_check
      _
    $region47: #{generator_forward.1} parent=1 // pred_check_branch
      %53 = sbr.rel (0) target = $region49
    $region48: #{generator_forward.1} parent=1 // pred_region
      %54 = dma.done [#allocation7], 6144
    $region49: #{generator_forward.1} parent=1 // pred_fallthru
      _
    %v56 = vld [vmem:[%s0] sm:$0x3]
    %v57 = vpack.c.bf16 %v56, %v56
    %v58 = vld [vmem:[#allocation6] sm:$0xff]
    %v59 = vld [vmem:[#allocation6 + $0x8] sm:$0xff]
    %v60 = vld [vmem:[#allocation6 + $0x10] sm:$0xff]
    %v61 = vld [vmem:[#allocation6 + $0x18] sm:$0xff]
    %v62 = vld [vmem:[#allocation6 + $0x20] sm:$0xff]
    %v63 = vld [vmem:[#allocation6 + $0x28] sm:$0xff]
    %v64 = vld [vmem:[#allocation6 + $0x30] sm:$0xff]
    %v65 = vld [vmem:[#allocation6 + $0x38] sm:$0xff]
    %v66 = vld [vmem:[#allocation6 + $0x40] sm:$0xff]
    %v67 = vld [vmem:[#allocation6 + $0x48] sm:$0xff]
    %v68 = vld [vmem:[#allocation6 + $0x50] sm:$0xff]
    %v69 = vld [vmem:[#allocation6 + $0x58] sm:$0xff]
    %v70 = vld [vmem:[#allocation6 + $0x60] sm:$0xff]
    %v71 = vld [vmem:[#allocation6 + $0x68] sm:$0xff]
    %v72 = vld [vmem:[#allocation6 + $0x70] sm:$0xff]
    %v73 = vld [vmem:[#allocation6 + $0x78] sm:$0xff]
    %v74 = vld [vmem:[#allocation6 + $0x80] sm:$0xff]
    %v75 = vld [vmem:[#allocation6 + $0x88] sm:$0xff]
    %v76 = vld [vmem:[#allocation6 + $0x90] sm:$0xff]
    %v77 = vld [vmem:[#allocation6 + $0x98] sm:$0xff]
    %v78 = vld [vmem:[#allocation6 + $0xa0] sm:$0xff]
    %v79 = vld [vmem:[#allocation6 + $0xa8] sm:$0xff]
    %v80 = vld [vmem:[#allocation6 + $0xb0] sm:$0xff]
    %v81 = vld [vmem:[#allocation6 + $0xb8] sm:$0xff]
    %v82 = vld [vmem:[#allocation6 + $0xc0] sm:$0xff]
    %v83 = vld [vmem:[#allocation6 + $0xc8] sm:$0xff]
    %v84 = vld [vmem:[#allocation6 + $0xd0] sm:$0xff]
    %v85 = vld [vmem:[#allocation6 + $0xd8] sm:$0xff]
    %v86 = vld [vmem:[#allocation6 + $0xe0] sm:$0xff]
    %v87 = vld [vmem:[#allocation6 + $0xe8] sm:$0xff]
    %v88 = vld [vmem:[#allocation6 + $0xf0] sm:$0xff]
    %v89 = vld [vmem:[#allocation6 + $0xf8] sm:$0xff]
    %v90 = vld [vmem:[#allocation6 + $0x100] sm:$0xff]
    %v91 = vld [vmem:[#allocation6 + $0x108] sm:$0xff]
    %v92 = vld [vmem:[#allocation6 + $0x110] sm:$0xff]
    %v93 = vld [vmem:[#allocation6 + $0x118] sm:$0xff]
    %v94 = vld [vmem:[#allocation6 + $0x120] sm:$0xff]
    %v95 = vld [vmem:[#allocation6 + $0x128] sm:$0xff]
    %v96 = vld [vmem:[#allocation6 + $0x130] sm:$0xff]
    %v97 = vld [vmem:[#allocation6 + $0x138] sm:$0xff]
    %v98 = vld [vmem:[#allocation6 + $0x140] sm:$0xff]
    %v99 = vld [vmem:[#allocation6 + $0x148] sm:$0xff]
    %v100 = vld [vmem:[#allocation6 + $0x150] sm:$0xff]
    %v101 = vld [vmem:[#allocation6 + $0x158] sm:$0xff]
    %v102 = vld [vmem:[#allocation6 + $0x160] sm:$0xff]
    %v103 = vld [vmem:[#allocation6 + $0x168] sm:$0xff]
    %v104 = vld [vmem:[#allocation6 + $0x170] sm:$0xff]
    %v105 = vld [vmem:[#allocation6 + $0x178] sm:$0xff]
    %v106 = vld [vmem:[%s2] sm:$0x3f]
    %v108 = vlaneseq
    %v109 = vshrl.u32 %v108, 7
    %v110 = vsub.s32 0, %v109
    %v111 = vrot.slane %v106, %v110
    %v112 = vlaneseq
    %v113 = vshrl.u32 %v112, 7
    %v114 = vsub.s32 1, %v113
    %v115 = vrot.slane %v106, %v114
    %v116 = vlaneseq
    %v117 = vshrl.u32 %v116, 7
    %v118 = vsub.s32 2, %v117
    %v119 = vrot.slane %v106, %v118
    %v120 = vlaneseq
    %v121 = vshrl.u32 %v120, 7
    %v122 = vsub.s32 3, %v121
    %v123 = vrot.slane %v106, %v122
    %v124 = vlaneseq
    %v125 = vshrl.u32 %v124, 7
    %v126 = vsub.s32 4, %v125
    %v127 = vrot.slane %v106, %v126
    %v128 = vlaneseq
    %v129 = vshrl.u32 %v128, 7
    %v130 = vsub.s32 5, %v129
    %v131 = vrot.slane %v106, %v130
    %v186 = vunpack.c.l.b16 %v58
    %v187 = vunpack.c.h.b16 %v58
    %v188 = vunpack.c.l.b16 %v59
    %v189 = vunpack.c.h.b16 %v59
    %v190 = vunpack.c.l.b16 %v60
    %v191 = vunpack.c.h.b16 %v60
    %v192 = vunpack.c.l.b16 %v61
    %v193 = vunpack.c.h.b16 %v61
    %v194 = vunpack.c.l.b16 %v62
    %v195 = vunpack.c.h.b16 %v62
    %v196 = vunpack.c.l.b16 %v63
    %v197 = vunpack.c.h.b16 %v63
    %v198 = vunpack.c.l.b16 %v64
    %v199 = vunpack.c.h.b16 %v64
    %v200 = vunpack.c.l.b16 %v65
    %v201 = vunpack.c.h.b16 %v65
    %v202 = vunpack.c.l.b16 %v66
    %v203 = vunpack.c.h.b16 %v66
    %v204 = vunpack.c.l.b16 %v67
    %v205 = vunpack.c.h.b16 %v67
    %v206 = vunpack.c.l.b16 %v68
    %v207 = vunpack.c.h.b16 %v68
    %v208 = vunpack.c.l.b16 %v69
    %v209 = vunpack.c.h.b16 %v69
    %v210 = vunpack.c.l.b16 %v70
    %v211 = vunpack.c.h.b16 %v70
    %v212 = vunpack.c.l.b16 %v71
    %v213 = vunpack.c.h.b16 %v71
    %v214 = vunpack.c.l.b16 %v72
    %v215 = vunpack.c.h.b16 %v72
    %v216 = vunpack.c.l.b16 %v73
    %v217 = vunpack.c.h.b16 %v73
    %v218 = vunpack.c.l.b16 %v74
    %v219 = vunpack.c.h.b16 %v74
    %v220 = vunpack.c.l.b16 %v75
    %v221 = vunpack.c.h.b16 %v75
    %v222 = vunpack.c.l.b16 %v76
    %v223 = vunpack.c.h.b16 %v76
    %v224 = vunpack.c.l.b16 %v77
    %v225 = vunpack.c.h.b16 %v77
    %v226 = vunpack.c.l.b16 %v78
    %v227 = vunpack.c.h.b16 %v78
    %v228 = vunpack.c.l.b16 %v79
    %v229 = vunpack.c.h.b16 %v79
    %v230 = vunpack.c.l.b16 %v80
    %v231 = vunpack.c.h.b16 %v80
    %v232 = vunpack.c.l.b16 %v81
    %v233 = vunpack.c.h.b16 %v81
    %v234 = vunpack.c.l.b16 %v82
    %v235 = vunpack.c.h.b16 %v82
    %v236 = vunpack.c.l.b16 %v83
    %v237 = vunpack.c.h.b16 %v83
    %v238 = vunpack.c.l.b16 %v84
    %v239 = vunpack.c.h.b16 %v84
    %v240 = vunpack.c.l.b16 %v85
    %v241 = vunpack.c.h.b16 %v85
    %v242 = vunpack.c.l.b16 %v86
    %v243 = vunpack.c.h.b16 %v86
    %v244 = vunpack.c.l.b16 %v87
    %v245 = vunpack.c.h.b16 %v87
    %v246 = vunpack.c.l.b16 %v88
    %v247 = vunpack.c.h.b16 %v88
    %v248 = vunpack.c.l.b16 %v89
    %v249 = vunpack.c.h.b16 %v89
    %v250 = vunpack.c.l.b16 %v90
    %v251 = vunpack.c.h.b16 %v90
    %v252 = vunpack.c.l.b16 %v91
    %v253 = vunpack.c.h.b16 %v91
    %v254 = vunpack.c.l.b16 %v92
    %v255 = vunpack.c.h.b16 %v92
    %v256 = vunpack.c.l.b16 %v93
    %v257 = vunpack.c.h.b16 %v93
    %v258 = vunpack.c.l.b16 %v94
    %v259 = vunpack.c.h.b16 %v94
    %v260 = vunpack.c.l.b16 %v95
    %v261 = vunpack.c.h.b16 %v95
    %v262 = vunpack.c.l.b16 %v96
    %v263 = vunpack.c.h.b16 %v96
    %v264 = vunpack.c.l.b16 %v97
    %v265 = vunpack.c.h.b16 %v97
    %v266 = vunpack.c.l.b16 %v98
    %v267 = vunpack.c.h.b16 %v98
    %v268 = vunpack.c.l.b16 %v99
    %v269 = vunpack.c.h.b16 %v99
    %v270 = vunpack.c.l.b16 %v100
    %v271 = vunpack.c.h.b16 %v100
    %v272 = vunpack.c.l.b16 %v101
    %v273 = vunpack.c.h.b16 %v101
    %v274 = vunpack.c.l.b16 %v102
    %v275 = vunpack.c.h.b16 %v102
    %v276 = vunpack.c.l.b16 %v103
    %v277 = vunpack.c.h.b16 %v103
    %v278 = vunpack.c.l.b16 %v104
    %v279 = vunpack.c.h.b16 %v104
    %v280 = vunpack.c.l.b16 %v105
    %v281 = vunpack.c.h.b16 %v105
    %v282 = vpack.c.b16 %v192, %v186
    %v283 = vpack.c.b16 %v193, %v187
    %v284 = vpack.c.b16 %v194, %v188
    %v285 = vpack.c.b16 %v195, %v189
    %v286 = vpack.c.b16 %v196, %v190
    %v287 = vpack.c.b16 %v197, %v191
    %v288 = vpack.c.b16 %v204, %v198
    %v289 = vpack.c.b16 %v205, %v199
    %v290 = vpack.c.b16 %v206, %v200
    %v291 = vpack.c.b16 %v207, %v201
    %v292 = vpack.c.b16 %v208, %v202
    %v293 = vpack.c.b16 %v209, %v203
    %v294 = vpack.c.b16 %v216, %v210
    %v295 = vpack.c.b16 %v217, %v211
    %v296 = vpack.c.b16 %v218, %v212
    %v297 = vpack.c.b16 %v219, %v213
    %v298 = vpack.c.b16 %v220, %v214
    %v299 = vpack.c.b16 %v221, %v215
    %v300 = vpack.c.b16 %v228, %v222
    %v301 = vpack.c.b16 %v229, %v223
    %v302 = vpack.c.b16 %v230, %v224
    %v303 = vpack.c.b16 %v231, %v225
    %v304 = vpack.c.b16 %v232, %v226
    %v305 = vpack.c.b16 %v233, %v227
    %v306 = vpack.c.b16 %v240, %v234
    %v307 = vpack.c.b16 %v241, %v235
    %v308 = vpack.c.b16 %v242, %v236
    %v309 = vpack.c.b16 %v243, %v237
    %v310 = vpack.c.b16 %v244, %v238
    %v311 = vpack.c.b16 %v245, %v239
    %v312 = vpack.c.b16 %v252, %v246
    %v313 = vpack.c.b16 %v253, %v247
    %v314 = vpack.c.b16 %v254, %v248
    %v315 = vpack.c.b16 %v255, %v249
    %v316 = vpack.c.b16 %v256, %v250
    %v317 = vpack.c.b16 %v257, %v251
    %v318 = vpack.c.b16 %v264, %v258
    %v319 = vpack.c.b16 %v265, %v259
    %v320 = vpack.c.b16 %v266, %v260
    %v321 = vpack.c.b16 %v267, %v261
    %v322 = vpack.c.b16 %v268, %v262
    %v323 = vpack.c.b16 %v269, %v263
    %v324 = vpack.c.b16 %v276, %v270
    %v325 = vpack.c.b16 %v277, %v271
    %v326 = vpack.c.b16 %v278, %v272
    %v327 = vpack.c.b16 %v279, %v273
    %v328 = vpack.c.b16 %v280, %v274
    %v329 = vpack.c.b16 %v281, %v275
    %378 = vmatprep.subr.bf16.mxu0 %v325
    %379 = vmatpush1.bf16.msra.mxu0 %v324
    %380 = vmatprep.subr.bf16.mxu0 %v319
    %381 = vmatpush1.bf16.msra.mxu0 %v318
    %382 = vmatprep.subr.bf16.mxu0 %v313
    %383 = vmatpush1.bf16.msra.mxu0 %v312
    %384 = vmatprep.subr.bf16.mxu0 %v307
    %385 = vmatpush1.bf16.msra.mxu0 %v306
    %386 = vmatprep.subr.bf16.mxu0 %v301
    %387 = vmatpush1.bf16.msra.mxu0 %v300
    %388 = vmatprep.subr.bf16.mxu0 %v295
    %389 = vmatpush1.bf16.msra.mxu0 %v294
    %390 = vmatprep.subr.bf16.mxu0 %v289
    %391 = vmatpush1.bf16.msra.mxu0 %v288
    %392 = vmatprep.subr.bf16.mxu0 %v283
    %393 = vmatpush1.bf16.msra.mxu0 %v282
    %394 = vmatprep.subr.bf16.mxu0 0
    %395 = vmatpush2.bf16.msra.mxu0 0
    %396 = vmatprep.subr.bf16.mxu0 0
    %397 = vmatpush2.bf16.msra.mxu0 0
    %398 = vmatprep.subr.bf16.mxu0 0
    %399 = vmatpush2.bf16.msra.mxu0 0
    %400 = vmatprep.subr.bf16.mxu0 0
    %401 = vmatpush2.bf16.msra.mxu0 0
    %402 = vmatprep.subr.bf16.mxu0 0
    %403 = vmatpush2.bf16.msra.mxu0 0
    %404 = vmatprep.subr.bf16.mxu0 0
    %405 = vmatpush2.bf16.msra.mxu0 0
    %406 = vmatprep.subr.bf16.mxu0 0
    %407 = vmatpush2.bf16.msra.mxu0 0
    %408 = vmatprep.subr.bf16.mxu0 0
    %409 = vmatpush2.bf16.msra.mxu0 0
    %410 = vmatprep.mubr.bf16.mxu0 0
    %411 = vmatmul.mubr.bf16.gmra.mxu0 %v57
    %v412 = vpop.f32.mrf.mxu0
    %v413 = vadd.f32 %v111, %v412
    %v414 = vpop.f32.mrf.mxu0
    %v415 = vadd.f32 %v115, %v414
    %v416 = vpop.f32.mrf.mxu0
    %v417 = vpop.f32.mrf.mxu0
    %418 = vdwg.mxu0
    %419 = vmatprep.subr.bf16.mxu0 %v327
    %420 = vmatpush1.bf16.msra.mxu0 %v326
    %421 = vmatprep.subr.bf16.mxu0 %v321
    %422 = vmatpush1.bf16.msra.mxu0 %v320
    %423 = vmatprep.subr.bf16.mxu0 %v315
    %424 = vmatpush1.bf16.msra.mxu0 %v314
    %425 = vmatprep.subr.bf16.mxu0 %v309
    %426 = vmatpush1.bf16.msra.mxu0 %v308
    %427 = vmatprep.subr.bf16.mxu0 %v303
    %428 = vmatpush1.bf16.msra.mxu0 %v302
    %429 = vmatprep.subr.bf16.mxu0 %v297
    %430 = vmatpush1.bf16.msra.mxu0 %v296
    %431 = vmatprep.subr.bf16.mxu0 %v291
    %432 = vmatpush1.bf16.msra.mxu0 %v290
    %433 = vmatprep.subr.bf16.mxu0 %v285
    %434 = vmatpush1.bf16.msra.mxu0 %v284
    %435 = vmatprep.subr.bf16.mxu0 0
    %436 = vmatpush2.bf16.msra.mxu0 0
    %437 = vmatprep.subr.bf16.mxu0 0
    %438 = vmatpush2.bf16.msra.mxu0 0
    %439 = vmatprep.subr.bf16.mxu0 0
    %440 = vmatpush2.bf16.msra.mxu0 0
    %441 = vmatprep.subr.bf16.mxu0 0
    %442 = vmatpush2.bf16.msra.mxu0 0
    %443 = vmatprep.subr.bf16.mxu0 0
    %444 = vmatpush2.bf16.msra.mxu0 0
    %445 = vmatprep.subr.bf16.mxu0 0
    %446 = vmatpush2.bf16.msra.mxu0 0
    %447 = vmatprep.subr.bf16.mxu0 0
    %448 = vmatpush2.bf16.msra.mxu0 0
    %449 = vmatprep.subr.bf16.mxu0 0
    %450 = vmatpush2.bf16.msra.mxu0 0
    %451 = vmatprep.mubr.bf16.mxu0 0
    %452 = vmatmul.mubr.bf16.gmra.mxu0 %v57
    %v453 = vpop.f32.mrf.mxu0
    %v454 = vadd.f32 %v119, %v453
    %v455 = vpop.f32.mrf.mxu0
    %v456 = vadd.f32 %v123, %v455
    %v457 = vpop.f32.mrf.mxu0
    %v458 = vpop.f32.mrf.mxu0
    %459 = vdwg.mxu0
    %460 = vmatprep.subr.bf16.mxu0 %v329
    %461 = vmatpush1.bf16.msra.mxu0 %v328
    %462 = vmatprep.subr.bf16.mxu0 %v323
    %463 = vmatpush1.bf16.msra.mxu0 %v322
    %464 = vmatprep.subr.bf16.mxu0 %v317
    %465 = vmatpush1.bf16.msra.mxu0 %v316
    %466 = vmatprep.subr.bf16.mxu0 %v311
    %467 = vmatpush1.bf16.msra.mxu0 %v310
    %468 = vmatprep.subr.bf16.mxu0 %v305
    %469 = vmatpush1.bf16.msra.mxu0 %v304
    %470 = vmatprep.subr.bf16.mxu0 %v299
    %471 = vmatpush1.bf16.msra.mxu0 %v298
    %472 = vmatprep.subr.bf16.mxu0 %v293
    %473 = vmatpush1.bf16.msra.mxu0 %v292
    %474 = vmatprep.subr.bf16.mxu0 %v287
    %475 = vmatpush1.bf16.msra.mxu0 %v286
    %476 = vmatprep.subr.bf16.mxu0 0
    %477 = vmatpush2.bf16.msra.mxu0 0
    %478 = vmatprep.subr.bf16.mxu0 0
    %479 = vmatpush2.bf16.msra.mxu0 0
    %480 = vmatprep.subr.bf16.mxu0 0
    %481 = vmatpush2.bf16.msra.mxu0 0
    %482 = vmatprep.subr.bf16.mxu0 0
    %483 = vmatpush2.bf16.msra.mxu0 0
    %484 = vmatprep.subr.bf16.mxu0 0
    %485 = vmatpush2.bf16.msra.mxu0 0
    %486 = vmatprep.subr.bf16.mxu0 0
    %487 = vmatpush2.bf16.msra.mxu0 0
    %488 = vmatprep.subr.bf16.mxu0 0
    %489 = vmatpush2.bf16.msra.mxu0 0
    %490 = vmatprep.subr.bf16.mxu0 0
    %491 = vmatpush2.bf16.msra.mxu0 0
    %492 = vmatprep.mubr.bf16.mxu0 0
    %493 = vmatmul.mubr.bf16.gmra.mxu0 %v57
    %v494 = vpop.f32.mrf.mxu0
    %v495 = vadd.f32 %v127, %v494
    %v496 = vpop.f32.mrf.mxu0
    %v497 = vadd.f32 %v131, %v496
    %v498 = vpop.f32.mrf.mxu0
    %v499 = vpop.f32.mrf.mxu0
    %500 = vdwg.mxu0
    %vm501 = vcmask 253952
    %502 = vst.msk [vmem:[#allocation2 + $0x7] sm:$0x1] %vm501, 0.0
    %503 = vst.msk [vmem:[#allocation2 + $0x2f] sm:$0x1] %vm501, 0.0
    %504 = vst.msk [vmem:[#allocation2 + $0x20] sm:$0x1] %vm501, 0.0
    %505 = vst.msk [vmem:[#allocation2 + $0x48] sm:$0x1] %vm501, 0.0
    %507 = vrot.lane.b32.xlu0 %v413, 96
    %v508 = vpop.permute.xlu0 %507
    %510 = vrot.lane.b32.xlu0 %v413, 64
    %v511 = vpop.permute.xlu0 %510
    %513 = vrot.lane.b32.xlu0 %v413, 32
    %v514 = vpop.permute.xlu0 %513
    %517 = vrot.lane.b32.xlu0 %v415, 96
    %v518 = vpop.permute.xlu0 %517
    %520 = vrot.lane.b32.xlu0 %v415, 64
    %v521 = vpop.permute.xlu0 %520
    %523 = vrot.lane.b32.xlu0 %v415, 32
    %v524 = vpop.permute.xlu0 %523
    %527 = vrot.lane.b32.xlu0 %v454, 96
    %v528 = vpop.permute.xlu0 %527
    %530 = vrot.lane.b32.xlu0 %v454, 64
    %v531 = vpop.permute.xlu0 %530
    %533 = vrot.lane.b32.xlu0 %v454, 32
    %v534 = vpop.permute.xlu0 %533
    %537 = vrot.lane.b32.xlu0 %v456, 96
    %v538 = vpop.permute.xlu0 %537
    %540 = vrot.lane.b32.xlu0 %v456, 64
    %v541 = vpop.permute.xlu0 %540
    %543 = vrot.lane.b32.xlu0 %v456, 32
    %v544 = vpop.permute.xlu0 %543
    %547 = vrot.lane.b32.xlu0 %v495, 96
    %v548 = vpop.permute.xlu0 %547
    %550 = vrot.lane.b32.xlu0 %v495, 64
    %v551 = vpop.permute.xlu0 %550
    %553 = vrot.lane.b32.xlu0 %v495, 32
    %v554 = vpop.permute.xlu0 %553
    %557 = vrot.lane.b32.xlu0 %v497, 96
    %v558 = vpop.permute.xlu0 %557
    %560 = vrot.lane.b32.xlu0 %v497, 64
    %v561 = vpop.permute.xlu0 %560
    %563 = vrot.lane.b32.xlu0 %v497, 32
    %v564 = vpop.permute.xlu0 %563
    %v566 = vcombine.low %v413, %v511
    %v568 = vunpack.c.l.s4 1983009808
    %v569 = vunpack.c.0.s8 %v568
    %v570 = vlaneseq
    %v571 = vshrl.u32 %v570, 7
    %v572 = vsub.s32 %v569, %v571
    %v573 = vrot.slane %v566, %v572
    %v574 = vcombine.low %v508, %v514
    %v576 = vunpack.c.l.s4 1983009808
    %v577 = vunpack.c.0.s8 %v576
    %v578 = vlaneseq
    %v579 = vshrl.u32 %v578, 7
    %v580 = vsub.s32 %v577, %v579
    %v581 = vrot.slane %v574, %v580
    %v582 = vcombine.low %v415, %v521
    %v584 = vunpack.c.l.s4 1983009808
    %v585 = vunpack.c.0.s8 %v584
    %v586 = vlaneseq
    %v587 = vshrl.u32 %v586, 7
    %v588 = vsub.s32 %v585, %v587
    %v589 = vrot.slane %v582, %v588
    %v590 = vcombine.low %v518, %v524
    %v592 = vunpack.c.l.s4 1983009808
    %v593 = vunpack.c.0.s8 %v592
    %v594 = vlaneseq
    %v595 = vshrl.u32 %v594, 7
    %v596 = vsub.s32 %v593, %v595
    %v597 = vrot.slane %v590, %v596
    %v598 = vcombine.low %v573, %v581
    %v600 = vunpack.c.l.s4 1934713408
    %v601 = vunpack.c.0.s8 %v600
    %v602 = vlaneseq
    %v603 = vshrl.u32 %v602, 7
    %v604 = vsub.s32 %v601, %v603
    %v605 = vrot.slane %v598, %v604
    %v606 = vcombine.low %v589, %v597
    %v608 = vunpack.c.l.s4 1934713408
    %v609 = vunpack.c.0.s8 %v608
    %v610 = vlaneseq
    %v611 = vshrl.u32 %v610, 7
    %v612 = vsub.s32 %v609, %v611
    %v613 = vrot.slane %v606, %v612
    %v614 = vcombine.low %v605, %v613
    %v615 = vcombine.high %v605, %v613
    %v616 = vcombine.low %v454, %v531
    %v618 = vunpack.c.l.s4 1983009808
    %v619 = vunpack.c.0.s8 %v618
    %v620 = vlaneseq
    %v621 = vshrl.u32 %v620, 7
    %v622 = vsub.s32 %v619, %v621
    %v623 = vrot.slane %v616, %v622
    %v624 = vcombine.low %v528, %v534
    %v626 = vunpack.c.l.s4 1983009808
    %v627 = vunpack.c.0.s8 %v626
    %v628 = vlaneseq
    %v629 = vshrl.u32 %v628, 7
    %v630 = vsub.s32 %v627, %v629
    %v631 = vrot.slane %v624, %v630
    %v632 = vcombine.low %v456, %v541
    %v634 = vunpack.c.l.s4 1983009808
    %v635 = vunpack.c.0.s8 %v634
    %v636 = vlaneseq
    %v637 = vshrl.u32 %v636, 7
    %v638 = vsub.s32 %v635, %v637
    %v639 = vrot.slane %v632, %v638
    %v640 = vcombine.low %v538, %v544
    %v642 = vunpack.c.l.s4 1983009808
    %v643 = vunpack.c.0.s8 %v642
    %v644 = vlaneseq
    %v645 = vshrl.u32 %v644, 7
    %v646 = vsub.s32 %v643, %v645
    %v647 = vrot.slane %v640, %v646
    %v648 = vcombine.low %v623, %v631
    %v650 = vunpack.c.l.s4 1934713408
    %v651 = vunpack.c.0.s8 %v650
    %v652 = vlaneseq
    %v653 = vshrl.u32 %v652, 7
    %v654 = vsub.s32 %v651, %v653
    %v655 = vrot.slane %v648, %v654
    %v656 = vcombine.low %v639, %v647
    %v658 = vunpack.c.l.s4 1934713408
    %v659 = vunpack.c.0.s8 %v658
    %v660 = vlaneseq
    %v661 = vshrl.u32 %v660, 7
    %v662 = vsub.s32 %v659, %v661
    %v663 = vrot.slane %v656, %v662
    %v664 = vcombine.low %v655, %v663
    %v665 = vcombine.high %v655, %v663
    %v666 = vcombine.low %v495, %v551
    %v668 = vunpack.c.l.s4 1983009808
    %v669 = vunpack.c.0.s8 %v668
    %v670 = vlaneseq
    %v671 = vshrl.u32 %v670, 7
    %v672 = vsub.s32 %v669, %v671
    %v673 = vrot.slane %v666, %v672
    %v674 = vcombine.low %v548, %v554
    %v676 = vunpack.c.l.s4 1983009808
    %v677 = vunpack.c.0.s8 %v676
    %v678 = vlaneseq
    %v679 = vshrl.u32 %v678, 7
    %v680 = vsub.s32 %v677, %v679
    %v681 = vrot.slane %v674, %v680
    %v682 = vcombine.low %v497, %v561
    %v684 = vunpack.c.l.s4 1983009808
    %v685 = vunpack.c.0.s8 %v684
    %v686 = vlaneseq
    %v687 = vshrl.u32 %v686, 7
    %v688 = vsub.s32 %v685, %v687
    %v689 = vrot.slane %v682, %v688
    %v690 = vcombine.low %v558, %v564
    %v692 = vunpack.c.l.s4 1983009808
    %v693 = vunpack.c.0.s8 %v692
    %v694 = vlaneseq
    %v695 = vshrl.u32 %v694, 7
    %v696 = vsub.s32 %v693, %v695
    %v697 = vrot.slane %v690, %v696
    %v698 = vcombine.low %v673, %v681
    %v700 = vunpack.c.l.s4 1934713408
    %v701 = vunpack.c.0.s8 %v700
    %v702 = vlaneseq
    %v703 = vshrl.u32 %v702, 7
    %v704 = vsub.s32 %v701, %v703
    %v705 = vrot.slane %v698, %v704
    %v706 = vcombine.low %v689, %v697
    %v708 = vunpack.c.l.s4 1934713408
    %v709 = vunpack.c.0.s8 %v708
    %v710 = vlaneseq
    %v711 = vshrl.u32 %v710, 7
    %v712 = vsub.s32 %v709, %v711
    %v713 = vrot.slane %v706, %v712
    %v714 = vcombine.low %v705, %v713
    %v715 = vcombine.high %v705, %v713
    %vm716 = vcmask 261120
    %717 = vst.msk [vmem:[#allocation2 + $0x8] sm:$0xff] %vm716, %v614
    %718 = vst.msk [vmem:[#allocation2 + $0x10] sm:$0xff] %vm716, %v664
    %719 = vst.msk [vmem:[#allocation2 + $0x18] sm:$0xff] %vm716, %v714
    %720 = vst.msk [vmem:[#allocation2 + $0x30] sm:$0xff] %vm716, %v615
    %721 = vst.msk [vmem:[#allocation2 + $0x38] sm:$0xff] %vm716, %v665
    %722 = vst.msk [vmem:[#allocation2 + $0x40] sm:$0xff] %vm716, %v715
    %v723 = vld [vmem:[#allocation2 + $0x7] sm:$0xff]
    %v724 = vld [vmem:[#allocation2 + $0xf] sm:$0xff]
    %v725 = vld [vmem:[#allocation2 + $0x17] sm:$0xff]
    %v726 = vld [vmem:[#allocation2 + $0x2f] sm:$0xff]
    %v727 = vld [vmem:[#allocation2 + $0x37] sm:$0xff]
    %v728 = vld [vmem:[#allocation2 + $0x3f] sm:$0xff]
    %v729 = vld [vmem:[#allocation2 + $0x8] sm:$0xff]
    %v730 = vld [vmem:[#allocation2 + $0x10] sm:$0xff]
    %v731 = vld [vmem:[#allocation2 + $0x18] sm:$0xff]
    %v732 = vld [vmem:[#allocation2 + $0x30] sm:$0xff]
    %v733 = vld [vmem:[#allocation2 + $0x38] sm:$0xff]
    %v734 = vld [vmem:[#allocation2 + $0x40] sm:$0xff]
    %v735 = vld [vmem:[#allocation2 + $0x9] sm:$0xff]
    %v736 = vld [vmem:[#allocation2 + $0x11] sm:$0xff]
    %v737 = vld [vmem:[#allocation2 + $0x19] sm:$0xff]
    %v738 = vld [vmem:[#allocation2 + $0x31] sm:$0xff]
    %v739 = vld [vmem:[#allocation2 + $0x39] sm:$0xff]
    %v740 = vld [vmem:[#allocation2 + $0x41] sm:$0xff]
    %747 = vrot.lane.b32.xlu0 %v729, 32
    %v748 = vpop.permute.xlu0 %747
    %749 = vrot.lane.b32.xlu0 %v730, 32
    %v750 = vpop.permute.xlu0 %749
    %751 = vrot.lane.b32.xlu0 %v731, 32
    %v752 = vpop.permute.xlu0 %751
    %753 = vrot.lane.b32.xlu0 %v732, 32
    %v754 = vpop.permute.xlu0 %753
    %755 = vrot.lane.b32.xlu0 %v733, 32
    %v756 = vpop.permute.xlu0 %755
    %757 = vrot.lane.b32.xlu0 %v734, 32
    %v758 = vpop.permute.xlu0 %757
    %771 = vrot.lane.b32.xlu0 %v735, 64
    %v772 = vpop.permute.xlu0 %771
    %773 = vrot.lane.b32.xlu0 %v736, 64
    %v774 = vpop.permute.xlu0 %773
    %775 = vrot.lane.b32.xlu0 %v737, 64
    %v776 = vpop.permute.xlu0 %775
    %777 = vrot.lane.b32.xlu0 %v738, 64
    %v778 = vpop.permute.xlu0 %777
    %779 = vrot.lane.b32.xlu0 %v739, 64
    %v780 = vpop.permute.xlu0 %779
    %781 = vrot.lane.b32.xlu0 %v740, 64
    %v782 = vpop.permute.xlu0 %781
    %v789 = vsel %vm716, %v723, %v748
    %v790 = vsel %vm716, %v724, %v750
    %v791 = vsel %vm716, %v725, %v752
    %v792 = vsel %vm716, %v726, %v754
    %v793 = vsel %vm716, %v727, %v756
    %v794 = vsel %vm716, %v728, %v758
    %vm795 = vcmask 523264
    %v796 = vsel %vm795, %v789, %v772
    %v797 = vsel %vm795, %v790, %v774
    %v798 = vsel %vm795, %v791, %v776
    %v799 = vsel %vm795, %v792, %v778
    %v800 = vsel %vm795, %v793, %v780
    %v801 = vsel %vm795, %v794, %v782
    %v802 = vpack.c.bf16 %v797, %v796
    %v803 = vpack.c.bf16 %v799, %v798
    %v804 = vpack.c.bf16 %v801, %v800
    %v805 = vld [vmem:[%s3] sm:$0xf]
    %v806 = vld [vmem:[%s3 + $0x4] sm:$0xf]
    %v807 = vld [vmem:[%s3 + $0x8] sm:$0xf]
    %v808 = vld [vmem:[%s3 + $0xc] sm:$0xf]
    %v809 = vld [vmem:[%s3 + $0x10] sm:$0xf]
    %v810 = vld [vmem:[%s3 + $0x14] sm:$0xf]
    %v811 = vld [vmem:[%s3 + $0x18] sm:$0xf]
    %v812 = vld [vmem:[%s3 + $0x1c] sm:$0xf]
    %v813 = vld [vmem:[%s3 + $0x20] sm:$0xf]
    %v814 = vld [vmem:[%s3 + $0x24] sm:$0xf]
    %v815 = vld [vmem:[%s3 + $0x28] sm:$0xf]
    %v816 = vld [vmem:[%s3 + $0x2c] sm:$0xf]
    %v817 = vld [vmem:[%s4] sm:$0x1]
    %v819 = vlaneseq
    %v820 = vshrl.u32 %v819, 7
    %v821 = vsub.s32 0, %v820
    %v822 = vrot.slane %v817, %v821
    %v836 = vunpack.c.l.b16 %v805
    %v837 = vunpack.c.l.b16 %v806
    %v838 = vunpack.c.l.b16 %v807
    %v839 = vunpack.c.l.b16 %v808
    %v840 = vunpack.c.l.b16 %v809
    %v841 = vunpack.c.l.b16 %v810
    %v842 = vunpack.c.l.b16 %v811
    %v843 = vunpack.c.l.b16 %v812
    %v844 = vunpack.c.l.b16 %v813
    %v845 = vunpack.c.l.b16 %v814
    %v846 = vunpack.c.l.b16 %v815
    %v847 = vunpack.c.l.b16 %v816
    %v848 = vpack.c.b16 %v837, %v836
    %v849 = vpack.c.b16 %v839, %v838
    %v850 = vpack.c.b16 %v841, %v840
    %v851 = vpack.c.b16 %v843, %v842
    %v852 = vpack.c.b16 %v845, %v844
    %v853 = vpack.c.b16 %v847, %v846
    %vm860 = vcmask 785408
    %v862 = vsel %vm860, %v802, 0
    %v865 = vsel %vm860, %v803, 0
    %v868 = vsel %vm860, %v804, 0
    %870 = vmatprep.subr.bf16.mxu0 0
    %871 = vmatpush1.bf16.msra.mxu0 0
    %872 = vmatprep.subr.bf16.mxu0 0
    %873 = vmatpush1.bf16.msra.mxu0 0
    %874 = vmatprep.subr.bf16.mxu0 0
    %875 = vmatpush1.bf16.msra.mxu0 %v853
    %876 = vmatprep.subr.bf16.mxu0 0
    %877 = vmatpush1.bf16.msra.mxu0 %v852
    %878 = vmatprep.subr.bf16.mxu0 0
    %879 = vmatpush1.bf16.msra.mxu0 %v851
    %880 = vmatprep.subr.bf16.mxu0 0
    %881 = vmatpush1.bf16.msra.mxu0 %v850
    %882 = vmatprep.subr.bf16.mxu0 0
    %883 = vmatpush1.bf16.msra.mxu0 %v849
    %884 = vmatprep.subr.bf16.mxu0 0
    %885 = vmatpush1.bf16.msra.mxu0 %v848
    %886 = vmatprep.subr.bf16.mxu0 0
    %887 = vmatpush2.bf16.msra.mxu0 0
    %888 = vmatprep.subr.bf16.mxu0 0
    %889 = vmatpush2.bf16.msra.mxu0 0
    %890 = vmatprep.subr.bf16.mxu0 0
    %891 = vmatpush2.bf16.msra.mxu0 0
    %892 = vmatprep.subr.bf16.mxu0 0
    %893 = vmatpush2.bf16.msra.mxu0 0
    %894 = vmatprep.subr.bf16.mxu0 0
    %895 = vmatpush2.bf16.msra.mxu0 0
    %896 = vmatprep.subr.bf16.mxu0 0
    %897 = vmatpush2.bf16.msra.mxu0 0
    %898 = vmatprep.subr.bf16.mxu0 0
    %899 = vmatpush2.bf16.msra.mxu0 0
    %900 = vmatprep.subr.bf16.mxu0 0
    %901 = vmatpush2.bf16.msra.mxu0 0
    %902 = vmatprep.mubr.bf16.mxu0 0
    %903 = vmatmul.mubr.bf16.gmra.mxu0 %v862
    %v904 = vpop.f32.mrf.mxu0
    %v905 = vadd.f32 %v822, %v904
    %v906 = vpop.f32.mrf.mxu0
    %v907 = vpop.f32.mrf.mxu0
    %v908 = vadd.f32 %v822, %v907
    %v909 = vpop.f32.mrf.mxu0
    %910 = vmatprep.mubr.bf16.mxu0 0
    %911 = vmatmul.mubr.bf16.gmra.mxu0 %v865
    %v912 = vpop.f32.mrf.mxu0
    %v913 = vadd.f32 %v822, %v912
    %v914 = vpop.f32.mrf.mxu0
    %v915 = vpop.f32.mrf.mxu0
    %v916 = vadd.f32 %v822, %v915
    %v917 = vpop.f32.mrf.mxu0
    %918 = vmatprep.mubr.bf16.mxu0 0
    %919 = vmatmul.mubr.bf16.gmra.mxu0 %v868
    %v920 = vpop.f32.mrf.mxu0
    %v921 = vadd.f32 %v822, %v920
    %v922 = vpop.f32.mrf.mxu0
    %v923 = vpop.f32.mrf.mxu0
    %v924 = vadd.f32 %v822, %v923
    %v925 = vpop.f32.mrf.mxu0
    %926 = vdwg.mxu0
    %v927 = vmul.f32 %v905, 0.2
    %v928 = vmul.f32 %v908, 0.2
    %v929 = vmul.f32 %v913, 0.2
    %v930 = vmul.f32 %v916, 0.2
    %v931 = vmul.f32 %v921, 0.2
    %v932 = vmul.f32 %v924, 0.2
    %v933 = vmax.f32 %v905, %v927
    %v934 = vmax.f32 %v908, %v928
    %v935 = vmax.f32 %v913, %v929
    %v936 = vmax.f32 %v916, %v930
    %v937 = vmax.f32 %v921, %v931
    %v938 = vmax.f32 %v924, %v932
    %v945 = vcombine.high %v933, %v933
    %v947 = vunpack.c.l.s4 1966171168
    %v948 = vunpack.c.0.s8 %v947
    %v949 = vlaneseq
    %v950 = vshrl.u32 %v949, 7
    %v951 = vsub.s32 %v948, %v950
    %v952 = vrot.slane %v933, %v951
    %v954 = vunpack.c.l.s4 1966171168
    %v955 = vunpack.c.0.s8 %v954
    %v956 = vlaneseq
    %v957 = vshrl.u32 %v956, 7
    %v958 = vsub.s32 %v955, %v957
    %v959 = vrot.slane %v945, %v958
    %v960 = vcombine.high %v952, %v952
    %v961 = vcombine.high %v959, %v959
    %v963 = vunpack.c.l.s4 1966171168
    %v964 = vunpack.c.0.s8 %v963
    %v965 = vlaneseq
    %v966 = vshrl.u32 %v965, 7
    %v967 = vsub.s32 %v964, %v966
    %v968 = vrot.slane %v952, %v967
    %v970 = vunpack.c.l.s4 1966171168
    %v971 = vunpack.c.0.s8 %v970
    %v972 = vlaneseq
    %v973 = vshrl.u32 %v972, 7
    %v974 = vsub.s32 %v971, %v973
    %v975 = vrot.slane %v959, %v974
    %v977 = vunpack.c.l.s4 1966171168
    %v978 = vunpack.c.0.s8 %v977
    %v979 = vlaneseq
    %v980 = vshrl.u32 %v979, 7
    %v981 = vsub.s32 %v978, %v980
    %v982 = vrot.slane %v960, %v981
    %v984 = vunpack.c.l.s4 1966171168
    %v985 = vunpack.c.0.s8 %v984
    %v986 = vlaneseq
    %v987 = vshrl.u32 %v986, 7
    %v988 = vsub.s32 %v985, %v987
    %v989 = vrot.slane %v961, %v988
    %v990 = vcombine.high %v968, %v968
    %v991 = vcombine.high %v975, %v975
    %v992 = vcombine.high %v982, %v982
    %v993 = vcombine.high %v989, %v989
    %v994 = vcombine.high %v934, %v934
    %v996 = vunpack.c.l.s4 1966171168
    %v997 = vunpack.c.0.s8 %v996
    %v998 = vlaneseq
    %v999 = vshrl.u32 %v998, 7
    %v1000 = vsub.s32 %v997, %v999
    %v1001 = vrot.slane %v934, %v1000
    %v1003 = vunpack.c.l.s4 1966171168
    %v1004 = vunpack.c.0.s8 %v1003
    %v1005 = vlaneseq
    %v1006 = vshrl.u32 %v1005, 7
    %v1007 = vsub.s32 %v1004, %v1006
    %v1008 = vrot.slane %v994, %v1007
    %v1009 = vcombine.high %v1001, %v1001
    %v1010 = vcombine.high %v1008, %v1008
    %v1012 = vunpack.c.l.s4 1966171168
    %v1013 = vunpack.c.0.s8 %v1012
    %v1014 = vlaneseq
    %v1015 = vshrl.u32 %v1014, 7
    %v1016 = vsub.s32 %v1013, %v1015
    %v1017 = vrot.slane %v1001, %v1016
    %v1019 = vunpack.c.l.s4 1966171168
    %v1020 = vunpack.c.0.s8 %v1019
    %v1021 = vlaneseq
    %v1022 = vshrl.u32 %v1021, 7
    %v1023 = vsub.s32 %v1020, %v1022
    %v1024 = vrot.slane %v1008, %v1023
    %v1026 = vunpack.c.l.s4 1966171168
    %v1027 = vunpack.c.0.s8 %v1026
    %v1028 = vlaneseq
    %v1029 = vshrl.u32 %v1028, 7
    %v1030 = vsub.s32 %v1027, %v1029
    %v1031 = vrot.slane %v1009, %v1030
    %v1033 = vunpack.c.l.s4 1966171168
    %v1034 = vunpack.c.0.s8 %v1033
    %v1035 = vlaneseq
    %v1036 = vshrl.u32 %v1035, 7
    %v1037 = vsub.s32 %v1034, %v1036
    %v1038 = vrot.slane %v1010, %v1037
    %v1039 = vcombine.high %v1017, %v1017
    %v1040 = vcombine.high %v1024, %v1024
    %v1041 = vcombine.high %v1031, %v1031
    %v1042 = vcombine.high %v1038, %v1038
    %v1043 = vcombine.high %v935, %v935
    %v1045 = vunpack.c.l.s4 1966171168
    %v1046 = vunpack.c.0.s8 %v1045
    %v1047 = vlaneseq
    %v1048 = vshrl.u32 %v1047, 7
    %v1049 = vsub.s32 %v1046, %v1048
    %v1050 = vrot.slane %v935, %v1049
    %v1052 = vunpack.c.l.s4 1966171168
    %v1053 = vunpack.c.0.s8 %v1052
    %v1054 = vlaneseq
    %v1055 = vshrl.u32 %v1054, 7
    %v1056 = vsub.s32 %v1053, %v1055
    %v1057 = vrot.slane %v1043, %v1056
    %v1058 = vcombine.high %v1050, %v1050
    %v1059 = vcombine.high %v1057, %v1057
    %v1061 = vunpack.c.l.s4 1966171168
    %v1062 = vunpack.c.0.s8 %v1061
    %v1063 = vlaneseq
    %v1064 = vshrl.u32 %v1063, 7
    %v1065 = vsub.s32 %v1062, %v1064
    %v1066 = vrot.slane %v1050, %v1065
    %v1068 = vunpack.c.l.s4 1966171168
    %v1069 = vunpack.c.0.s8 %v1068
    %v1070 = vlaneseq
    %v1071 = vshrl.u32 %v1070, 7
    %v1072 = vsub.s32 %v1069, %v1071
    %v1073 = vrot.slane %v1057, %v1072
    %v1075 = vunpack.c.l.s4 1966171168
    %v1076 = vunpack.c.0.s8 %v1075
    %v1077 = vlaneseq
    %v1078 = vshrl.u32 %v1077, 7
    %v1079 = vsub.s32 %v1076, %v1078
    %v1080 = vrot.slane %v1058, %v1079
    %v1082 = vunpack.c.l.s4 1966171168
    %v1083 = vunpack.c.0.s8 %v1082
    %v1084 = vlaneseq
    %v1085 = vshrl.u32 %v1084, 7
    %v1086 = vsub.s32 %v1083, %v1085
    %v1087 = vrot.slane %v1059, %v1086
    %v1088 = vcombine.high %v1066, %v1066
    %v1089 = vcombine.high %v1073, %v1073
    %v1090 = vcombine.high %v1080, %v1080
    %v1091 = vcombine.high %v1087, %v1087
    %v1092 = vcombine.high %v936, %v936
    %v1094 = vunpack.c.l.s4 1966171168
    %v1095 = vunpack.c.0.s8 %v1094
    %v1096 = vlaneseq
    %v1097 = vshrl.u32 %v1096, 7
    %v1098 = vsub.s32 %v1095, %v1097
    %v1099 = vrot.slane %v936, %v1098
    %v1101 = vunpack.c.l.s4 1966171168
    %v1102 = vunpack.c.0.s8 %v1101
    %v1103 = vlaneseq
    %v1104 = vshrl.u32 %v1103, 7
    %v1105 = vsub.s32 %v1102, %v1104
    %v1106 = vrot.slane %v1092, %v1105
    %v1107 = vcombine.high %v1099, %v1099
    %v1108 = vcombine.high %v1106, %v1106
    %v1110 = vunpack.c.l.s4 1966171168
    %v1111 = vunpack.c.0.s8 %v1110
    %v1112 = vlaneseq
    %v1113 = vshrl.u32 %v1112, 7
    %v1114 = vsub.s32 %v1111, %v1113
    %v1115 = vrot.slane %v1099, %v1114
    %v1117 = vunpack.c.l.s4 1966171168
    %v1118 = vunpack.c.0.s8 %v1117
    %v1119 = vlaneseq
    %v1120 = vshrl.u32 %v1119, 7
    %v1121 = vsub.s32 %v1118, %v1120
    %v1122 = vrot.slane %v1106, %v1121
    %v1124 = vunpack.c.l.s4 1966171168
    %v1125 = vunpack.c.0.s8 %v1124
    %v1126 = vlaneseq
    %v1127 = vshrl.u32 %v1126, 7
    %v1128 = vsub.s32 %v1125, %v1127
    %v1129 = vrot.slane %v1107, %v1128
    %v1131 = vunpack.c.l.s4 1966171168
    %v1132 = vunpack.c.0.s8 %v1131
    %v1133 = vlaneseq
    %v1134 = vshrl.u32 %v1133, 7
    %v1135 = vsub.s32 %v1132, %v1134
    %v1136 = vrot.slane %v1108, %v1135
    %v1137 = vcombine.high %v1115, %v1115
    %v1138 = vcombine.high %v1122, %v1122
    %v1139 = vcombine.high %v1129, %v1129
    %v1140 = vcombine.high %v1136, %v1136
    %v1141 = vcombine.high %v937, %v937
    %v1143 = vunpack.c.l.s4 1966171168
    %v1144 = vunpack.c.0.s8 %v1143
    %v1145 = vlaneseq
    %v1146 = vshrl.u32 %v1145, 7
    %v1147 = vsub.s32 %v1144, %v1146
    %v1148 = vrot.slane %v937, %v1147
    %v1150 = vunpack.c.l.s4 1966171168
    %v1151 = vunpack.c.0.s8 %v1150
    %v1152 = vlaneseq
    %v1153 = vshrl.u32 %v1152, 7
    %v1154 = vsub.s32 %v1151, %v1153
    %v1155 = vrot.slane %v1141, %v1154
    %v1156 = vcombine.high %v1148, %v1148
    %v1157 = vcombine.high %v1155, %v1155
    %v1159 = vunpack.c.l.s4 1966171168
    %v1160 = vunpack.c.0.s8 %v1159
    %v1161 = vlaneseq
    %v1162 = vshrl.u32 %v1161, 7
    %v1163 = vsub.s32 %v1160, %v1162
    %v1164 = vrot.slane %v1148, %v1163
    %v1166 = vunpack.c.l.s4 1966171168
    %v1167 = vunpack.c.0.s8 %v1166
    %v1168 = vlaneseq
    %v1169 = vshrl.u32 %v1168, 7
    %v1170 = vsub.s32 %v1167, %v1169
    %v1171 = vrot.slane %v1155, %v1170
    %v1173 = vunpack.c.l.s4 1966171168
    %v1174 = vunpack.c.0.s8 %v1173
    %v1175 = vlaneseq
    %v1176 = vshrl.u32 %v1175, 7
    %v1177 = vsub.s32 %v1174, %v1176
    %v1178 = vrot.slane %v1156, %v1177
    %v1180 = vunpack.c.l.s4 1966171168
    %v1181 = vunpack.c.0.s8 %v1180
    %v1182 = vlaneseq
    %v1183 = vshrl.u32 %v1182, 7
    %v1184 = vsub.s32 %v1181, %v1183
    %v1185 = vrot.slane %v1157, %v1184
    %v1186 = vcombine.high %v1164, %v1164
    %v1187 = vcombine.high %v1171, %v1171
    %v1188 = vcombine.high %v1178, %v1178
    %v1189 = vcombine.high %v1185, %v1185
    %v1190 = vcombine.high %v938, %v938
    %v1192 = vunpack.c.l.s4 1966171168
    %v1193 = vunpack.c.0.s8 %v1192
    %v1194 = vlaneseq
    %v1195 = vshrl.u32 %v1194, 7
    %v1196 = vsub.s32 %v1193, %v1195
    %v1197 = vrot.slane %v938, %v1196
    %v1199 = vunpack.c.l.s4 1966171168
    %v1200 = vunpack.c.0.s8 %v1199
    %v1201 = vlaneseq
    %v1202 = vshrl.u32 %v1201, 7
    %v1203 = vsub.s32 %v1200, %v1202
    %v1204 = vrot.slane %v1190, %v1203
    %v1205 = vcombine.high %v1197, %v1197
    %v1206 = vcombine.high %v1204, %v1204
    %v1208 = vunpack.c.l.s4 1966171168
    %v1209 = vunpack.c.0.s8 %v1208
    %v1210 = vlaneseq
    %v1211 = vshrl.u32 %v1210, 7
    %v1212 = vsub.s32 %v1209, %v1211
    %v1213 = vrot.slane %v1197, %v1212
    %v1215 = vunpack.c.l.s4 1966171168
    %v1216 = vunpack.c.0.s8 %v1215
    %v1217 = vlaneseq
    %v1218 = vshrl.u32 %v1217, 7
    %v1219 = vsub.s32 %v1216, %v1218
    %v1220 = vrot.slane %v1204, %v1219
    %v1222 = vunpack.c.l.s4 1966171168
    %v1223 = vunpack.c.0.s8 %v1222
    %v1224 = vlaneseq
    %v1225 = vshrl.u32 %v1224, 7
    %v1226 = vsub.s32 %v1223, %v1225
    %v1227 = vrot.slane %v1205, %v1226
    %v1229 = vunpack.c.l.s4 1966171168
    %v1230 = vunpack.c.0.s8 %v1229
    %v1231 = vlaneseq
    %v1232 = vshrl.u32 %v1231, 7
    %v1233 = vsub.s32 %v1230, %v1232
    %v1234 = vrot.slane %v1206, %v1233
    %v1235 = vcombine.high %v1213, %v1213
    %v1236 = vcombine.high %v1220, %v1220
    %v1237 = vcombine.high %v1227, %v1227
    %v1238 = vcombine.high %v1234, %v1234
    %v1239 = vlaneseq
    %v1240 = vshrl.u32 %v1239, 7
    %v1241 = vsub.s32 0, %v1240
    %v1242 = vrot.slane %v968, %v1241
    %v1243 = vlaneseq
    %v1244 = vshrl.u32 %v1243, 7
    %v1245 = vsub.s32 0, %v1244
    %v1246 = vrot.slane %v982, %v1245
    %v1247 = vlaneseq
    %v1248 = vshrl.u32 %v1247, 7
    %v1249 = vsub.s32 0, %v1248
    %v1250 = vrot.slane %v990, %v1249
    %v1251 = vlaneseq
    %v1252 = vshrl.u32 %v1251, 7
    %v1253 = vsub.s32 0, %v1252
    %v1254 = vrot.slane %v992, %v1253
    %v1255 = vlaneseq
    %v1256 = vshrl.u32 %v1255, 7
    %v1257 = vsub.s32 0, %v1256
    %v1258 = vrot.slane %v975, %v1257
    %v1259 = vlaneseq
    %v1260 = vshrl.u32 %v1259, 7
    %v1261 = vsub.s32 0, %v1260
    %v1262 = vrot.slane %v989, %v1261
    %v1263 = vlaneseq
    %v1264 = vshrl.u32 %v1263, 7
    %v1265 = vsub.s32 0, %v1264
    %v1266 = vrot.slane %v991, %v1265
    %v1267 = vlaneseq
    %v1268 = vshrl.u32 %v1267, 7
    %v1269 = vsub.s32 0, %v1268
    %v1270 = vrot.slane %v993, %v1269
    %v1271 = vlaneseq
    %v1272 = vshrl.u32 %v1271, 7
    %v1273 = vsub.s32 0, %v1272
    %v1274 = vrot.slane %v1017, %v1273
    %v1275 = vlaneseq
    %v1276 = vshrl.u32 %v1275, 7
    %v1277 = vsub.s32 0, %v1276
    %v1278 = vrot.slane %v1031, %v1277
    %v1279 = vlaneseq
    %v1280 = vshrl.u32 %v1279, 7
    %v1281 = vsub.s32 0, %v1280
    %v1282 = vrot.slane %v1039, %v1281
    %v1283 = vlaneseq
    %v1284 = vshrl.u32 %v1283, 7
    %v1285 = vsub.s32 0, %v1284
    %v1286 = vrot.slane %v1041, %v1285
    %v1287 = vlaneseq
    %v1288 = vshrl.u32 %v1287, 7
    %v1289 = vsub.s32 0, %v1288
    %v1290 = vrot.slane %v1024, %v1289
    %v1291 = vlaneseq
    %v1292 = vshrl.u32 %v1291, 7
    %v1293 = vsub.s32 0, %v1292
    %v1294 = vrot.slane %v1038, %v1293
    %v1295 = vlaneseq
    %v1296 = vshrl.u32 %v1295, 7
    %v1297 = vsub.s32 0, %v1296
    %v1298 = vrot.slane %v1040, %v1297
    %v1299 = vlaneseq
    %v1300 = vshrl.u32 %v1299, 7
    %v1301 = vsub.s32 0, %v1300
    %v1302 = vrot.slane %v1042, %v1301
    %v1303 = vlaneseq
    %v1304 = vshrl.u32 %v1303, 7
    %v1305 = vsub.s32 0, %v1304
    %v1306 = vrot.slane %v1066, %v1305
    %v1307 = vlaneseq
    %v1308 = vshrl.u32 %v1307, 7
    %v1309 = vsub.s32 0, %v1308
    %v1310 = vrot.slane %v1080, %v1309
    %v1311 = vlaneseq
    %v1312 = vshrl.u32 %v1311, 7
    %v1313 = vsub.s32 0, %v1312
    %v1314 = vrot.slane %v1088, %v1313
    %v1315 = vlaneseq
    %v1316 = vshrl.u32 %v1315, 7
    %v1317 = vsub.s32 0, %v1316
    %v1318 = vrot.slane %v1090, %v1317
    %v1319 = vlaneseq
    %v1320 = vshrl.u32 %v1319, 7
    %v1321 = vsub.s32 0, %v1320
    %v1322 = vrot.slane %v1073, %v1321
    %v1323 = vlaneseq
    %v1324 = vshrl.u32 %v1323, 7
    %v1325 = vsub.s32 0, %v1324
    %v1326 = vrot.slane %v1087, %v1325
    %v1327 = vlaneseq
    %v1328 = vshrl.u32 %v1327, 7
    %v1329 = vsub.s32 0, %v1328
    %v1330 = vrot.slane %v1089, %v1329
    %v1331 = vlaneseq
    %v1332 = vshrl.u32 %v1331, 7
    %v1333 = vsub.s32 0, %v1332
    %v1334 = vrot.slane %v1091, %v1333
    %v1335 = vlaneseq
    %v1336 = vshrl.u32 %v1335, 7
    %v1337 = vsub.s32 0, %v1336
    %v1338 = vrot.slane %v1115, %v1337
    %v1339 = vlaneseq
    %v1340 = vshrl.u32 %v1339, 7
    %v1341 = vsub.s32 0, %v1340
    %v1342 = vrot.slane %v1129, %v1341
    %v1343 = vlaneseq
    %v1344 = vshrl.u32 %v1343, 7
    %v1345 = vsub.s32 0, %v1344
    %v1346 = vrot.slane %v1137, %v1345
    %v1347 = vlaneseq
    %v1348 = vshrl.u32 %v1347, 7
    %v1349 = vsub.s32 0, %v1348
    %v1350 = vrot.slane %v1139, %v1349
    %v1351 = vlaneseq
    %v1352 = vshrl.u32 %v1351, 7
    %v1353 = vsub.s32 0, %v1352
    %v1354 = vrot.slane %v1122, %v1353
    %v1355 = vlaneseq
    %v1356 = vshrl.u32 %v1355, 7
    %v1357 = vsub.s32 0, %v1356
    %v1358 = vrot.slane %v1136, %v1357
    %v1359 = vlaneseq
    %v1360 = vshrl.u32 %v1359, 7
    %v1361 = vsub.s32 0, %v1360
    %v1362 = vrot.slane %v1138, %v1361
    %v1363 = vlaneseq
    %v1364 = vshrl.u32 %v1363, 7
    %v1365 = vsub.s32 0, %v1364
    %v1366 = vrot.slane %v1140, %v1365
    %v1367 = vlaneseq
    %v1368 = vshrl.u32 %v1367, 7
    %v1369 = vsub.s32 0, %v1368
    %v1370 = vrot.slane %v1164, %v1369
    %v1371 = vlaneseq
    %v1372 = vshrl.u32 %v1371, 7
    %v1373 = vsub.s32 0, %v1372
    %v1374 = vrot.slane %v1178, %v1373
    %v1375 = vlaneseq
    %v1376 = vshrl.u32 %v1375, 7
    %v1377 = vsub.s32 0, %v1376
    %v1378 = vrot.slane %v1186, %v1377
    %v1379 = vlaneseq
    %v1380 = vshrl.u32 %v1379, 7
    %v1381 = vsub.s32 0, %v1380
    %v1382 = vrot.slane %v1188, %v1381
    %v1383 = vlaneseq
    %v1384 = vshrl.u32 %v1383, 7
    %v1385 = vsub.s32 0, %v1384
    %v1386 = vrot.slane %v1171, %v1385
    %v1387 = vlaneseq
    %v1388 = vshrl.u32 %v1387, 7
    %v1389 = vsub.s32 0, %v1388
    %v1390 = vrot.slane %v1185, %v1389
    %v1391 = vlaneseq
    %v1392 = vshrl.u32 %v1391, 7
    %v1393 = vsub.s32 0, %v1392
    %v1394 = vrot.slane %v1187, %v1393
    %v1395 = vlaneseq
    %v1396 = vshrl.u32 %v1395, 7
    %v1397 = vsub.s32 0, %v1396
    %v1398 = vrot.slane %v1189, %v1397
    %v1399 = vlaneseq
    %v1400 = vshrl.u32 %v1399, 7
    %v1401 = vsub.s32 0, %v1400
    %v1402 = vrot.slane %v1213, %v1401
    %v1403 = vlaneseq
    %v1404 = vshrl.u32 %v1403, 7
    %v1405 = vsub.s32 0, %v1404
    %v1406 = vrot.slane %v1227, %v1405
    %v1407 = vlaneseq
    %v1408 = vshrl.u32 %v1407, 7
    %v1409 = vsub.s32 0, %v1408
    %v1410 = vrot.slane %v1235, %v1409
    %v1411 = vlaneseq
    %v1412 = vshrl.u32 %v1411, 7
    %v1413 = vsub.s32 0, %v1412
    %v1414 = vrot.slane %v1237, %v1413
    %v1415 = vlaneseq
    %v1416 = vshrl.u32 %v1415, 7
    %v1417 = vsub.s32 0, %v1416
    %v1418 = vrot.slane %v1220, %v1417
    %v1419 = vlaneseq
    %v1420 = vshrl.u32 %v1419, 7
    %v1421 = vsub.s32 0, %v1420
    %v1422 = vrot.slane %v1234, %v1421
    %v1423 = vlaneseq
    %v1424 = vshrl.u32 %v1423, 7
    %v1425 = vsub.s32 0, %v1424
    %v1426 = vrot.slane %v1236, %v1425
    %v1427 = vlaneseq
    %v1428 = vshrl.u32 %v1427, 7
    %v1429 = vsub.s32 0, %v1428
    %v1430 = vrot.slane %v1238, %v1429
    %1431 = vst.msk [vmem:[#allocation3 + $0x7] sm:$0x1] %vm501, 0.0
    %1432 = vst.msk [vmem:[#allocation3 + $0x47] sm:$0x1] %vm501, 0.0
    %1433 = vst.msk [vmem:[#allocation3 + $0x38] sm:$0x1] %vm501, 0.0
    %1434 = vst.msk [vmem:[#allocation3 + $0x78] sm:$0x1] %vm501, 0.0
    %v1435 = vcombine.low %v1242, %v1246
    %v1436 = vcombine.low %v1250, %v1254
    %v1438 = vunpack.c.l.s4 1983009808
    %v1439 = vunpack.c.0.s8 %v1438
    %v1440 = vlaneseq
    %v1441 = vshrl.u32 %v1440, 7
    %v1442 = vsub.s32 %v1439, %v1441
    %v1443 = vrot.slane %v1435, %v1442
    %v1445 = vunpack.c.l.s4 1983009808
    %v1446 = vunpack.c.0.s8 %v1445
    %v1447 = vlaneseq
    %v1448 = vshrl.u32 %v1447, 7
    %v1449 = vsub.s32 %v1446, %v1448
    %v1450 = vrot.slane %v1436, %v1449
    %v1451 = vcombine.low %v1443, %v1450
    %v1452 = vcombine.low %v1258, %v1262
    %v1453 = vcombine.low %v1266, %v1270
    %v1455 = vunpack.c.l.s4 1983009808
    %v1456 = vunpack.c.0.s8 %v1455
    %v1457 = vlaneseq
    %v1458 = vshrl.u32 %v1457, 7
    %v1459 = vsub.s32 %v1456, %v1458
    %v1460 = vrot.slane %v1452, %v1459
    %v1462 = vunpack.c.l.s4 1983009808
    %v1463 = vunpack.c.0.s8 %v1462
    %v1464 = vlaneseq
    %v1465 = vshrl.u32 %v1464, 7
    %v1466 = vsub.s32 %v1463, %v1465
    %v1467 = vrot.slane %v1453, %v1466
    %v1468 = vcombine.low %v1460, %v1467
    %v1469 = vcombine.low %v1274, %v1278
    %v1470 = vcombine.low %v1282, %v1286
    %v1472 = vunpack.c.l.s4 1983009808
    %v1473 = vunpack.c.0.s8 %v1472
    %v1474 = vlaneseq
    %v1475 = vshrl.u32 %v1474, 7
    %v1476 = vsub.s32 %v1473, %v1475
    %v1477 = vrot.slane %v1469, %v1476
    %v1479 = vunpack.c.l.s4 1983009808
    %v1480 = vunpack.c.0.s8 %v1479
    %v1481 = vlaneseq
    %v1482 = vshrl.u32 %v1481, 7
    %v1483 = vsub.s32 %v1480, %v1482
    %v1484 = vrot.slane %v1470, %v1483
    %v1485 = vcombine.low %v1477, %v1484
    %v1486 = vcombine.low %v1290, %v1294
    %v1487 = vcombine.low %v1298, %v1302
    %v1489 = vunpack.c.l.s4 1983009808
    %v1490 = vunpack.c.0.s8 %v1489
    %v1491 = vlaneseq
    %v1492 = vshrl.u32 %v1491, 7
    %v1493 = vsub.s32 %v1490, %v1492
    %v1494 = vrot.slane %v1486, %v1493
    %v1496 = vunpack.c.l.s4 1983009808
    %v1497 = vunpack.c.0.s8 %v1496
    %v1498 = vlaneseq
    %v1499 = vshrl.u32 %v1498, 7
    %v1500 = vsub.s32 %v1497, %v1499
    %v1501 = vrot.slane %v1487, %v1500
    %v1502 = vcombine.low %v1494, %v1501
    %v1503 = vcombine.low %v1306, %v1310
    %v1504 = vcombine.low %v1314, %v1318
    %v1506 = vunpack.c.l.s4 1983009808
    %v1507 = vunpack.c.0.s8 %v1506
    %v1508 = vlaneseq
    %v1509 = vshrl.u32 %v1508, 7
    %v1510 = vsub.s32 %v1507, %v1509
    %v1511 = vrot.slane %v1503, %v1510
    %v1513 = vunpack.c.l.s4 1983009808
    %v1514 = vunpack.c.0.s8 %v1513
    %v1515 = vlaneseq
    %v1516 = vshrl.u32 %v1515, 7
    %v1517 = vsub.s32 %v1514, %v1516
    %v1518 = vrot.slane %v1504, %v1517
    %v1519 = vcombine.low %v1511, %v1518
    %v1520 = vcombine.low %v1322, %v1326
    %v1521 = vcombine.low %v1330, %v1334
    %v1523 = vunpack.c.l.s4 1983009808
    %v1524 = vunpack.c.0.s8 %v1523
    %v1525 = vlaneseq
    %v1526 = vshrl.u32 %v1525, 7
    %v1527 = vsub.s32 %v1524, %v1526
    %v1528 = vrot.slane %v1520, %v1527
    %v1530 = vunpack.c.l.s4 1983009808
    %v1531 = vunpack.c.0.s8 %v1530
    %v1532 = vlaneseq
    %v1533 = vshrl.u32 %v1532, 7
    %v1534 = vsub.s32 %v1531, %v1533
    %v1535 = vrot.slane %v1521, %v1534
    %v1536 = vcombine.low %v1528, %v1535
    %v1537 = vcombine.low %v1338, %v1342
    %v1538 = vcombine.low %v1346, %v1350
    %v1540 = vunpack.c.l.s4 1983009808
    %v1541 = vunpack.c.0.s8 %v1540
    %v1542 = vlaneseq
    %v1543 = vshrl.u32 %v1542, 7
    %v1544 = vsub.s32 %v1541, %v1543
    %v1545 = vrot.slane %v1537, %v1544
    %v1547 = vunpack.c.l.s4 1983009808
    %v1548 = vunpack.c.0.s8 %v1547
    %v1549 = vlaneseq
    %v1550 = vshrl.u32 %v1549, 7
    %v1551 = vsub.s32 %v1548, %v1550
    %v1552 = vrot.slane %v1538, %v1551
    %v1553 = vcombine.low %v1545, %v1552
    %v1554 = vcombine.low %v1354, %v1358
    %v1555 = vcombine.low %v1362, %v1366
    %v1557 = vunpack.c.l.s4 1983009808
    %v1558 = vunpack.c.0.s8 %v1557
    %v1559 = vlaneseq
    %v1560 = vshrl.u32 %v1559, 7
    %v1561 = vsub.s32 %v1558, %v1560
    %v1562 = vrot.slane %v1554, %v1561
    %v1564 = vunpack.c.l.s4 1983009808
    %v1565 = vunpack.c.0.s8 %v1564
    %v1566 = vlaneseq
    %v1567 = vshrl.u32 %v1566, 7
    %v1568 = vsub.s32 %v1565, %v1567
    %v1569 = vrot.slane %v1555, %v1568
    %v1570 = vcombine.low %v1562, %v1569
    %v1571 = vcombine.low %v1370, %v1374
    %v1572 = vcombine.low %v1378, %v1382
    %v1574 = vunpack.c.l.s4 1983009808
    %v1575 = vunpack.c.0.s8 %v1574
    %v1576 = vlaneseq
    %v1577 = vshrl.u32 %v1576, 7
    %v1578 = vsub.s32 %v1575, %v1577
    %v1579 = vrot.slane %v1571, %v1578
    %v1581 = vunpack.c.l.s4 1983009808
    %v1582 = vunpack.c.0.s8 %v1581
    %v1583 = vlaneseq
    %v1584 = vshrl.u32 %v1583, 7
    %v1585 = vsub.s32 %v1582, %v1584
    %v1586 = vrot.slane %v1572, %v1585
    %v1587 = vcombine.low %v1579, %v1586
    %v1588 = vcombine.low %v1386, %v1390
    %v1589 = vcombine.low %v1394, %v1398
    %v1591 = vunpack.c.l.s4 1983009808
    %v1592 = vunpack.c.0.s8 %v1591
    %v1593 = vlaneseq
    %v1594 = vshrl.u32 %v1593, 7
    %v1595 = vsub.s32 %v1592, %v1594
    %v1596 = vrot.slane %v1588, %v1595
    %v1598 = vunpack.c.l.s4 1983009808
    %v1599 = vunpack.c.0.s8 %v1598
    %v1600 = vlaneseq
    %v1601 = vshrl.u32 %v1600, 7
    %v1602 = vsub.s32 %v1599, %v1601
    %v1603 = vrot.slane %v1589, %v1602
    %v1604 = vcombine.low %v1596, %v1603
    %v1605 = vcombine.low %v1402, %v1406
    %v1606 = vcombine.low %v1410, %v1414
    %v1608 = vunpack.c.l.s4 1983009808
    %v1609 = vunpack.c.0.s8 %v1608
    %v1610 = vlaneseq
    %v1611 = vshrl.u32 %v1610, 7
    %v1612 = vsub.s32 %v1609, %v1611
    %v1613 = vrot.slane %v1605, %v1612
    %v1615 = vunpack.c.l.s4 1983009808
    %v1616 = vunpack.c.0.s8 %v1615
    %v1617 = vlaneseq
    %v1618 = vshrl.u32 %v1617, 7
    %v1619 = vsub.s32 %v1616, %v1618
    %v1620 = vrot.slane %v1606, %v1619
    %v1621 = vcombine.low %v1613, %v1620
    %v1622 = vcombine.low %v1418, %v1422
    %v1623 = vcombine.low %v1426, %v1430
    %v1625 = vunpack.c.l.s4 1983009808
    %v1626 = vunpack.c.0.s8 %v1625
    %v1627 = vlaneseq
    %v1628 = vshrl.u32 %v1627, 7
    %v1629 = vsub.s32 %v1626, %v1628
    %v1630 = vrot.slane %v1622, %v1629
    %v1632 = vunpack.c.l.s4 1983009808
    %v1633 = vunpack.c.0.s8 %v1632
    %v1634 = vlaneseq
    %v1635 = vshrl.u32 %v1634, 7
    %v1636 = vsub.s32 %v1633, %v1635
    %v1637 = vrot.slane %v1623, %v1636
    %v1638 = vcombine.low %v1630, %v1637
    %1651 = vst.msk [vmem:[#allocation3 + $0x8] sm:$0xff] %vm716, %v1451
    %1652 = vst.msk [vmem:[#allocation3 + $0x10] sm:$0xff] %vm716, %v1468
    %1653 = vst.msk [vmem:[#allocation3 + $0x18] sm:$0xff] %vm716, %v1485
    %1654 = vst.msk [vmem:[#allocation3 + $0x20] sm:$0xff] %vm716, %v1502
    %1655 = vst.msk [vmem:[#allocation3 + $0x28] sm:$0xff] %vm716, %v1519
    %1656 = vst.msk [vmem:[#allocation3 + $0x30] sm:$0xff] %vm716, %v1536
    %1657 = vst.msk [vmem:[#allocation3 + $0x48] sm:$0xff] %vm716, %v1553
    %1658 = vst.msk [vmem:[#allocation3 + $0x50] sm:$0xff] %vm716, %v1570
    %1659 = vst.msk [vmem:[#allocation3 + $0x58] sm:$0xff] %vm716, %v1587
    %1660 = vst.msk [vmem:[#allocation3 + $0x60] sm:$0xff] %vm716, %v1604
    %1661 = vst.msk [vmem:[#allocation3 + $0x68] sm:$0xff] %vm716, %v1621
    %1662 = vst.msk [vmem:[#allocation3 + $0x70] sm:$0xff] %vm716, %v1638
    %v1663 = vld [vmem:[#allocation3 + $0x7] sm:$0xff]
    %v1664 = vld [vmem:[#allocation3 + $0xf] sm:$0xff]
    %v1665 = vld [vmem:[#allocation3 + $0x17] sm:$0xff]
    %v1666 = vld [vmem:[#allocation3 + $0x1f] sm:$0xff]
    %v1667 = vld [vmem:[#allocation3 + $0x27] sm:$0xff]
    %v1668 = vld [vmem:[#allocation3 + $0x2f] sm:$0xff]
    %v1669 = vld [vmem:[#allocation3 + $0x47] sm:$0xff]
    %v1670 = vld [vmem:[#allocation3 + $0x4f] sm:$0xff]
    %v1671 = vld [vmem:[#allocation3 + $0x57] sm:$0xff]
    %v1672 = vld [vmem:[#allocation3 + $0x5f] sm:$0xff]
    %v1673 = vld [vmem:[#allocation3 + $0x67] sm:$0xff]
    %v1674 = vld [vmem:[#allocation3 + $0x6f] sm:$0xff]
    %v1675 = vld [vmem:[#allocation3 + $0x8] sm:$0xff]
    %v1676 = vld [vmem:[#allocation3 + $0x10] sm:$0xff]
    %v1677 = vld [vmem:[#allocation3 + $0x18] sm:$0xff]
    %v1678 = vld [vmem:[#allocation3 + $0x20] sm:$0xff]
    %v1679 = vld [vmem:[#allocation3 + $0x28] sm:$0xff]
    %v1680 = vld [vmem:[#allocation3 + $0x30] sm:$0xff]
    %v1681 = vld [vmem:[#allocation3 + $0x48] sm:$0xff]
    %v1682 = vld [vmem:[#allocation3 + $0x50] sm:$0xff]
    %v1683 = vld [vmem:[#allocation3 + $0x58] sm:$0xff]
    %v1684 = vld [vmem:[#allocation3 + $0x60] sm:$0xff]
    %v1685 = vld [vmem:[#allocation3 + $0x68] sm:$0xff]
    %v1686 = vld [vmem:[#allocation3 + $0x70] sm:$0xff]
    %v1687 = vld [vmem:[#allocation3 + $0x9] sm:$0xff]
    %v1688 = vld [vmem:[#allocation3 + $0x11] sm:$0xff]
    %v1689 = vld [vmem:[#allocation3 + $0x19] sm:$0xff]
    %v1690 = vld [vmem:[#allocation3 + $0x21] sm:$0xff]
    %v1691 = vld [vmem:[#allocation3 + $0x29] sm:$0xff]
    %v1692 = vld [vmem:[#allocation3 + $0x31] sm:$0xff]
    %v1693 = vld [vmem:[#allocation3 + $0x49] sm:$0xff]
    %v1694 = vld [vmem:[#allocation3 + $0x51] sm:$0xff]
    %v1695 = vld [vmem:[#allocation3 + $0x59] sm:$0xff]
    %v1696 = vld [vmem:[#allocation3 + $0x61] sm:$0xff]
    %v1697 = vld [vmem:[#allocation3 + $0x69] sm:$0xff]
    %v1698 = vld [vmem:[#allocation3 + $0x71] sm:$0xff]
    %1711 = vrot.lane.b32.xlu0 %v1675, 32
    %v1712 = vpop.permute.xlu0 %1711
    %1713 = vrot.lane.b32.xlu0 %v1676, 32
    %v1714 = vpop.permute.xlu0 %1713
    %1715 = vrot.lane.b32.xlu0 %v1677, 32
    %v1716 = vpop.permute.xlu0 %1715
    %1717 = vrot.lane.b32.xlu0 %v1678, 32
    %v1718 = vpop.permute.xlu0 %1717
    %1719 = vrot.lane.b32.xlu0 %v1679, 32
    %v1720 = vpop.permute.xlu0 %1719
    %1721 = vrot.lane.b32.xlu0 %v1680, 32
    %v1722 = vpop.permute.xlu0 %1721
    %1723 = vrot.lane.b32.xlu0 %v1681, 32
    %v1724 = vpop.permute.xlu0 %1723
    %1725 = vrot.lane.b32.xlu0 %v1682, 32
    %v1726 = vpop.permute.xlu0 %1725
    %1727 = vrot.lane.b32.xlu0 %v1683, 32
    %v1728 = vpop.permute.xlu0 %1727
    %1729 = vrot.lane.b32.xlu0 %v1684, 32
    %v1730 = vpop.permute.xlu0 %1729
    %1731 = vrot.lane.b32.xlu0 %v1685, 32
    %v1732 = vpop.permute.xlu0 %1731
    %1733 = vrot.lane.b32.xlu0 %v1686, 32
    %v1734 = vpop.permute.xlu0 %1733
    %1759 = vrot.lane.b32.xlu0 %v1687, 64
    %v1760 = vpop.permute.xlu0 %1759
    %1761 = vrot.lane.b32.xlu0 %v1688, 64
    %v1762 = vpop.permute.xlu0 %1761
    %1763 = vrot.lane.b32.xlu0 %v1689, 64
    %v1764 = vpop.permute.xlu0 %1763
    %1765 = vrot.lane.b32.xlu0 %v1690, 64
    %v1766 = vpop.permute.xlu0 %1765
    %1767 = vrot.lane.b32.xlu0 %v1691, 64
    %v1768 = vpop.permute.xlu0 %1767
    %1769 = vrot.lane.b32.xlu0 %v1692, 64
    %v1770 = vpop.permute.xlu0 %1769
    %1771 = vrot.lane.b32.xlu0 %v1693, 64
    %v1772 = vpop.permute.xlu0 %1771
    %1773 = vrot.lane.b32.xlu0 %v1694, 64
    %v1774 = vpop.permute.xlu0 %1773
    %1775 = vrot.lane.b32.xlu0 %v1695, 64
    %v1776 = vpop.permute.xlu0 %1775
    %1777 = vrot.lane.b32.xlu0 %v1696, 64
    %v1778 = vpop.permute.xlu0 %1777
    %1779 = vrot.lane.b32.xlu0 %v1697, 64
    %v1780 = vpop.permute.xlu0 %1779
    %1781 = vrot.lane.b32.xlu0 %v1698, 64
    %v1782 = vpop.permute.xlu0 %1781
    %v1795 = vsel %vm716, %v1663, %v1712
    %v1796 = vsel %vm716, %v1664, %v1714
    %v1797 = vsel %vm716, %v1665, %v1716
    %v1798 = vsel %vm716, %v1666, %v1718
    %v1799 = vsel %vm716, %v1667, %v1720
    %v1800 = vsel %vm716, %v1668, %v1722
    %v1801 = vsel %vm716, %v1669, %v1724
    %v1802 = vsel %vm716, %v1670, %v1726
    %v1803 = vsel %vm716, %v1671, %v1728
    %v1804 = vsel %vm716, %v1672, %v1730
    %v1805 = vsel %vm716, %v1673, %v1732
    %v1806 = vsel %vm716, %v1674, %v1734
    %v1807 = vsel %vm795, %v1795, %v1760
    %v1808 = vsel %vm795, %v1796, %v1762
    %v1809 = vsel %vm795, %v1797, %v1764
    %v1810 = vsel %vm795, %v1798, %v1766
    %v1811 = vsel %vm795, %v1799, %v1768
    %v1812 = vsel %vm795, %v1800, %v1770
    %v1813 = vsel %vm795, %v1801, %v1772
    %v1814 = vsel %vm795, %v1802, %v1774
    %v1815 = vsel %vm795, %v1803, %v1776
    %v1816 = vsel %vm795, %v1804, %v1778
    %v1817 = vsel %vm795, %v1805, %v1780
    %v1818 = vsel %vm795, %v1806, %v1782
    %v1819 = vpack.c.bf16 %v1808, %v1807
    %v1820 = vpack.c.bf16 %v1810, %v1809
    %v1821 = vpack.c.bf16 %v1812, %v1811
    %v1822 = vpack.c.bf16 %v1814, %v1813
    %v1823 = vpack.c.bf16 %v1816, %v1815
    %v1824 = vpack.c.bf16 %v1818, %v1817
    %v1825 = vld [vmem:[%s5] sm:$0xf]
    %v1826 = vld [vmem:[%s5 + $0x4] sm:$0xf]
    %v1827 = vld [vmem:[%s5 + $0x8] sm:$0xf]
    %v1828 = vld [vmem:[%s5 + $0xc] sm:$0xf]
    %v1829 = vld [vmem:[%s5 + $0x10] sm:$0xf]
    %v1830 = vld [vmem:[%s5 + $0x14] sm:$0xf]
    %v1831 = vld [vmem:[%s5 + $0x18] sm:$0xf]
    %v1832 = vld [vmem:[%s5 + $0x1c] sm:$0xf]
    %v1833 = vld [vmem:[%s5 + $0x20] sm:$0xf]
    %v1834 = vld [vmem:[%s5 + $0x24] sm:$0xf]
    %v1835 = vld [vmem:[%s5 + $0x28] sm:$0xf]
    %v1836 = vld [vmem:[%s5 + $0x2c] sm:$0xf]
    %v1837 = vld [vmem:[%s6] sm:$0x1]
    %v1839 = vlaneseq
    %v1840 = vshrl.u32 %v1839, 7
    %v1841 = vsub.s32 0, %v1840
    %v1842 = vrot.slane %v1837, %v1841
    %v1856 = vunpack.c.l.b16 %v1825
    %v1857 = vunpack.c.l.b16 %v1826
    %v1858 = vunpack.c.l.b16 %v1827
    %v1859 = vunpack.c.l.b16 %v1828
    %v1860 = vunpack.c.l.b16 %v1829
    %v1861 = vunpack.c.l.b16 %v1830
    %v1862 = vunpack.c.l.b16 %v1831
    %v1863 = vunpack.c.l.b16 %v1832
    %v1864 = vunpack.c.l.b16 %v1833
    %v1865 = vunpack.c.l.b16 %v1834
    %v1866 = vunpack.c.l.b16 %v1835
    %v1867 = vunpack.c.l.b16 %v1836
    %v1868 = vpack.c.b16 %v1857, %v1856
    %v1869 = vpack.c.b16 %v1859, %v1858
    %v1870 = vpack.c.b16 %v1861, %v1860
    %v1871 = vpack.c.b16 %v1863, %v1862
    %v1872 = vpack.c.b16 %v1865, %v1864
    %v1873 = vpack.c.b16 %v1867, %v1866
    %v1881 = vsel %vm860, %v1819, 0
    %v1884 = vsel %vm860, %v1820, 0
    %v1887 = vsel %vm860, %v1821, 0
    %v1890 = vsel %vm860, %v1822, 0
    %v1893 = vsel %vm860, %v1823, 0
    %v1896 = vsel %vm860, %v1824, 0
    %1898 = vmatprep.subr.bf16.mxu0 0
    %1899 = vmatpush1.bf16.msra.mxu0 0
    %1900 = vmatprep.subr.bf16.mxu0 0
    %1901 = vmatpush1.bf16.msra.mxu0 0
    %1902 = vmatprep.subr.bf16.mxu0 0
    %1903 = vmatpush1.bf16.msra.mxu0 %v1873
    %1904 = vmatprep.subr.bf16.mxu0 0
    %1905 = vmatpush1.bf16.msra.mxu0 %v1872
    %1906 = vmatprep.subr.bf16.mxu0 0
    %1907 = vmatpush1.bf16.msra.mxu0 %v1871
    %1908 = vmatprep.subr.bf16.mxu0 0
    %1909 = vmatpush1.bf16.msra.mxu0 %v1870
    %1910 = vmatprep.subr.bf16.mxu0 0
    %1911 = vmatpush1.bf16.msra.mxu0 %v1869
    %1912 = vmatprep.subr.bf16.mxu0 0
    %1913 = vmatpush1.bf16.msra.mxu0 %v1868
    %1914 = vmatprep.subr.bf16.mxu0 0
    %1915 = vmatpush2.bf16.msra.mxu0 0
    %1916 = vmatprep.subr.bf16.mxu0 0
    %1917 = vmatpush2.bf16.msra.mxu0 0
    %1918 = vmatprep.subr.bf16.mxu0 0
    %1919 = vmatpush2.bf16.msra.mxu0 0
    %1920 = vmatprep.subr.bf16.mxu0 0
    %1921 = vmatpush2.bf16.msra.mxu0 0
    %1922 = vmatprep.subr.bf16.mxu0 0
    %1923 = vmatpush2.bf16.msra.mxu0 0
    %1924 = vmatprep.subr.bf16.mxu0 0
    %1925 = vmatpush2.bf16.msra.mxu0 0
    %1926 = vmatprep.subr.bf16.mxu0 0
    %1927 = vmatpush2.bf16.msra.mxu0 0
    %1928 = vmatprep.subr.bf16.mxu0 0
    %1929 = vmatpush2.bf16.msra.mxu0 0
    %1930 = vmatprep.mubr.bf16.mxu0 0
    %1931 = vmatmul.mubr.bf16.gmra.mxu0 %v1881
    %v1932 = vpop.f32.mrf.mxu0
    %v1933 = vadd.f32 %v1842, %v1932
    %v1934 = vpop.f32.mrf.mxu0
    %v1935 = vpop.f32.mrf.mxu0
    %v1936 = vadd.f32 %v1842, %v1935
    %v1937 = vpop.f32.mrf.mxu0
    %1938 = vmatprep.mubr.bf16.mxu0 0
    %1939 = vmatmul.mubr.bf16.gmra.mxu0 %v1884
    %v1940 = vpop.f32.mrf.mxu0
    %v1941 = vadd.f32 %v1842, %v1940
    %v1942 = vpop.f32.mrf.mxu0
    %v1943 = vpop.f32.mrf.mxu0
    %v1944 = vadd.f32 %v1842, %v1943
    %v1945 = vpop.f32.mrf.mxu0
    %1946 = vmatprep.mubr.bf16.mxu0 0
    %1947 = vmatmul.mubr.bf16.gmra.mxu0 %v1887
    %v1948 = vpop.f32.mrf.mxu0
    %v1949 = vadd.f32 %v1842, %v1948
    %v1950 = vpop.f32.mrf.mxu0
    %v1951 = vpop.f32.mrf.mxu0
    %v1952 = vadd.f32 %v1842, %v1951
    %v1953 = vpop.f32.mrf.mxu0
    %1954 = vmatprep.mubr.bf16.mxu0 0
    %1955 = vmatmul.mubr.bf16.gmra.mxu0 %v1890
    %v1956 = vpop.f32.mrf.mxu0
    %v1957 = vadd.f32 %v1842, %v1956
    %v1958 = vpop.f32.mrf.mxu0
    %v1959 = vpop.f32.mrf.mxu0
    %v1960 = vadd.f32 %v1842, %v1959
    %v1961 = vpop.f32.mrf.mxu0
    %1962 = vmatprep.mubr.bf16.mxu0 0
    %1963 = vmatmul.mubr.bf16.gmra.mxu0 %v1893
    %v1964 = vpop.f32.mrf.mxu0
    %v1965 = vadd.f32 %v1842, %v1964
    %v1966 = vpop.f32.mrf.mxu0
    %v1967 = vpop.f32.mrf.mxu0
    %v1968 = vadd.f32 %v1842, %v1967
    %v1969 = vpop.f32.mrf.mxu0
    %1970 = vmatprep.mubr.bf16.mxu0 0
    %1971 = vmatmul.mubr.bf16.gmra.mxu0 %v1896
    %v1972 = vpop.f32.mrf.mxu0
    %v1973 = vadd.f32 %v1842, %v1972
    %v1974 = vpop.f32.mrf.mxu0
    %v1975 = vpop.f32.mrf.mxu0
    %v1976 = vadd.f32 %v1842, %v1975
    %v1977 = vpop.f32.mrf.mxu0
    %1978 = vdwg.mxu0
    %v1979 = vmul.f32 %v1933, 0.2
    %v1980 = vmul.f32 %v1936, 0.2
    %v1981 = vmul.f32 %v1941, 0.2
    %v1982 = vmul.f32 %v1944, 0.2
    %v1983 = vmul.f32 %v1949, 0.2
    %v1984 = vmul.f32 %v1952, 0.2
    %v1985 = vmul.f32 %v1957, 0.2
    %v1986 = vmul.f32 %v1960, 0.2
    %v1987 = vmul.f32 %v1965, 0.2
    %v1988 = vmul.f32 %v1968, 0.2
    %v1989 = vmul.f32 %v1973, 0.2
    %v1990 = vmul.f32 %v1976, 0.2
    %v1991 = vmax.f32 %v1933, %v1979
    %v1992 = vmax.f32 %v1936, %v1980
    %v1993 = vmax.f32 %v1941, %v1981
    %v1994 = vmax.f32 %v1944, %v1982
    %v1995 = vmax.f32 %v1949, %v1983
    %v1996 = vmax.f32 %v1952, %v1984
    %v1997 = vmax.f32 %v1957, %v1985
    %v1998 = vmax.f32 %v1960, %v1986
    %v1999 = vmax.f32 %v1965, %v1987
    %v2000 = vmax.f32 %v1968, %v1988
    %v2001 = vmax.f32 %v1973, %v1989
    %v2002 = vmax.f32 %v1976, %v1990
    %2003 = vst.msk [vmem:[#allocation4 + $0x7] sm:$0x1] %vm501, 0.0
    %2004 = vst.msk [vmem:[#allocation4 + $0x47] sm:$0x1] %vm501, 0.0
    %2005 = vst.msk [vmem:[#allocation4 + $0x38] sm:$0x1] %vm501, 0.0
    %2006 = vst.msk [vmem:[#allocation4 + $0x78] sm:$0x1] %vm501, 0.0
    %2007 = vst.msk [vmem:[#allocation4 + $0x8] sm:$0xff] %vm716, %v1991
    %2008 = vst.msk [vmem:[#allocation4 + $0x10] sm:$0xff] %vm716, %v1992
    %2009 = vst.msk [vmem:[#allocation4 + $0x18] sm:$0xff] %vm716, %v1993
    %2010 = vst.msk [vmem:[#allocation4 + $0x20] sm:$0xff] %vm716, %v1994
    %2011 = vst.msk [vmem:[#allocation4 + $0x28] sm:$0xff] %vm716, %v1995
    %2012 = vst.msk [vmem:[#allocation4 + $0x30] sm:$0xff] %vm716, %v1996
    %2013 = vst.msk [vmem:[#allocation4 + $0x48] sm:$0xff] %vm716, %v1997
    %2014 = vst.msk [vmem:[#allocation4 + $0x50] sm:$0xff] %vm716, %v1998
    %2015 = vst.msk [vmem:[#allocation4 + $0x58] sm:$0xff] %vm716, %v1999
    %2016 = vst.msk [vmem:[#allocation4 + $0x60] sm:$0xff] %vm716, %v2000
    %2017 = vst.msk [vmem:[#allocation4 + $0x68] sm:$0xff] %vm716, %v2001
    %2018 = vst.msk [vmem:[#allocation4 + $0x70] sm:$0xff] %vm716, %v2002
    %v2019 = vld [vmem:[#allocation4 + $0x7] sm:$0xff]
    %v2020 = vld [vmem:[#allocation4 + $0xf] sm:$0xff]
    %v2021 = vld [vmem:[#allocation4 + $0x17] sm:$0xff]
    %v2022 = vld [vmem:[#allocation4 + $0x1f] sm:$0xff]
    %v2023 = vld [vmem:[#allocation4 + $0x27] sm:$0xff]
    %v2024 = vld [vmem:[#allocation4 + $0x2f] sm:$0xff]
    %v2025 = vld [vmem:[#allocation4 + $0x47] sm:$0xff]
    %v2026 = vld [vmem:[#allocation4 + $0x4f] sm:$0xff]
    %v2027 = vld [vmem:[#allocation4 + $0x57] sm:$0xff]
    %v2028 = vld [vmem:[#allocation4 + $0x5f] sm:$0xff]
    %v2029 = vld [vmem:[#allocation4 + $0x67] sm:$0xff]
    %v2030 = vld [vmem:[#allocation4 + $0x6f] sm:$0xff]
    %v2031 = vld [vmem:[#allocation4 + $0x8] sm:$0xff]
    %v2032 = vld [vmem:[#allocation4 + $0x10] sm:$0xff]
    %v2033 = vld [vmem:[#allocation4 + $0x18] sm:$0xff]
    %v2034 = vld [vmem:[#allocation4 + $0x20] sm:$0xff]
    %v2035 = vld [vmem:[#allocation4 + $0x28] sm:$0xff]
    %v2036 = vld [vmem:[#allocation4 + $0x30] sm:$0xff]
    %v2037 = vld [vmem:[#allocation4 + $0x48] sm:$0xff]
    %v2038 = vld [vmem:[#allocation4 + $0x50] sm:$0xff]
    %v2039 = vld [vmem:[#allocation4 + $0x58] sm:$0xff]
    %v2040 = vld [vmem:[#allocation4 + $0x60] sm:$0xff]
    %v2041 = vld [vmem:[#allocation4 + $0x68] sm:$0xff]
    %v2042 = vld [vmem:[#allocation4 + $0x70] sm:$0xff]
    %v2043 = vld [vmem:[#allocation4 + $0x9] sm:$0xff]
    %v2044 = vld [vmem:[#allocation4 + $0x11] sm:$0xff]
    %v2045 = vld [vmem:[#allocation4 + $0x19] sm:$0xff]
    %v2046 = vld [vmem:[#allocation4 + $0x21] sm:$0xff]
    %v2047 = vld [vmem:[#allocation4 + $0x29] sm:$0xff]
    %v2048 = vld [vmem:[#allocation4 + $0x31] sm:$0xff]
    %v2049 = vld [vmem:[#allocation4 + $0x49] sm:$0xff]
    %v2050 = vld [vmem:[#allocation4 + $0x51] sm:$0xff]
    %v2051 = vld [vmem:[#allocation4 + $0x59] sm:$0xff]
    %v2052 = vld [vmem:[#allocation4 + $0x61] sm:$0xff]
    %v2053 = vld [vmem:[#allocation4 + $0x69] sm:$0xff]
    %v2054 = vld [vmem:[#allocation4 + $0x71] sm:$0xff]
    %2067 = vrot.lane.b32.xlu0 %v2031, 32
    %v2068 = vpop.permute.xlu0 %2067
    %2069 = vrot.lane.b32.xlu0 %v2032, 32
    %v2070 = vpop.permute.xlu0 %2069
    %2071 = vrot.lane.b32.xlu0 %v2033, 32
    %v2072 = vpop.permute.xlu0 %2071
    %2073 = vrot.lane.b32.xlu0 %v2034, 32
    %v2074 = vpop.permute.xlu0 %2073
    %2075 = vrot.lane.b32.xlu0 %v2035, 32
    %v2076 = vpop.permute.xlu0 %2075
    %2077 = vrot.lane.b32.xlu0 %v2036, 32
    %v2078 = vpop.permute.xlu0 %2077
    %2079 = vrot.lane.b32.xlu0 %v2037, 32
    %v2080 = vpop.permute.xlu0 %2079
    %2081 = vrot.lane.b32.xlu0 %v2038, 32
    %v2082 = vpop.permute.xlu0 %2081
    %2083 = vrot.lane.b32.xlu0 %v2039, 32
    %v2084 = vpop.permute.xlu0 %2083
    %2085 = vrot.lane.b32.xlu0 %v2040, 32
    %v2086 = vpop.permute.xlu0 %2085
    %2087 = vrot.lane.b32.xlu0 %v2041, 32
    %v2088 = vpop.permute.xlu0 %2087
    %2089 = vrot.lane.b32.xlu0 %v2042, 32
    %v2090 = vpop.permute.xlu0 %2089
    %2115 = vrot.lane.b32.xlu0 %v2043, 64
    %v2116 = vpop.permute.xlu0 %2115
    %2117 = vrot.lane.b32.xlu0 %v2044, 64
    %v2118 = vpop.permute.xlu0 %2117
    %2119 = vrot.lane.b32.xlu0 %v2045, 64
    %v2120 = vpop.permute.xlu0 %2119
    %2121 = vrot.lane.b32.xlu0 %v2046, 64
    %v2122 = vpop.permute.xlu0 %2121
    %2123 = vrot.lane.b32.xlu0 %v2047, 64
    %v2124 = vpop.permute.xlu0 %2123
    %2125 = vrot.lane.b32.xlu0 %v2048, 64
    %v2126 = vpop.permute.xlu0 %2125
    %2127 = vrot.lane.b32.xlu0 %v2049, 64
    %v2128 = vpop.permute.xlu0 %2127
    %2129 = vrot.lane.b32.xlu0 %v2050, 64
    %v2130 = vpop.permute.xlu0 %2129
    %2131 = vrot.lane.b32.xlu0 %v2051, 64
    %v2132 = vpop.permute.xlu0 %2131
    %2133 = vrot.lane.b32.xlu0 %v2052, 64
    %v2134 = vpop.permute.xlu0 %2133
    %2135 = vrot.lane.b32.xlu0 %v2053, 64
    %v2136 = vpop.permute.xlu0 %2135
    %2137 = vrot.lane.b32.xlu0 %v2054, 64
    %v2138 = vpop.permute.xlu0 %2137
    %v2151 = vsel %vm716, %v2019, %v2068
    %v2152 = vsel %vm716, %v2020, %v2070
    %v2153 = vsel %vm716, %v2021, %v2072
    %v2154 = vsel %vm716, %v2022, %v2074
    %v2155 = vsel %vm716, %v2023, %v2076
    %v2156 = vsel %vm716, %v2024, %v2078
    %v2157 = vsel %vm716, %v2025, %v2080
    %v2158 = vsel %vm716, %v2026, %v2082
    %v2159 = vsel %vm716, %v2027, %v2084
    %v2160 = vsel %vm716, %v2028, %v2086
    %v2161 = vsel %vm716, %v2029, %v2088
    %v2162 = vsel %vm716, %v2030, %v2090
    %v2163 = vsel %vm795, %v2151, %v2116
    %v2164 = vsel %vm795, %v2152, %v2118
    %v2165 = vsel %vm795, %v2153, %v2120
    %v2166 = vsel %vm795, %v2154, %v2122
    %v2167 = vsel %vm795, %v2155, %v2124
    %v2168 = vsel %vm795, %v2156, %v2126
    %v2169 = vsel %vm795, %v2157, %v2128
    %v2170 = vsel %vm795, %v2158, %v2130
    %v2171 = vsel %vm795, %v2159, %v2132
    %v2172 = vsel %vm795, %v2160, %v2134
    %v2173 = vsel %vm795, %v2161, %v2136
    %v2174 = vsel %vm795, %v2162, %v2138
    %v2175 = vpack.c.bf16 %v2164, %v2163
    %v2176 = vpack.c.bf16 %v2166, %v2165
    %v2177 = vpack.c.bf16 %v2168, %v2167
    %v2178 = vpack.c.bf16 %v2170, %v2169
    %v2179 = vpack.c.bf16 %v2172, %v2171
    %v2180 = vpack.c.bf16 %v2174, %v2173
    %v2181 = vld [vmem:[%s7] sm:$0xf]
    %v2182 = vld [vmem:[%s7 + $0x4] sm:$0xf]
    %v2183 = vld [vmem:[%s7 + $0x8] sm:$0xf]
    %v2184 = vld [vmem:[%s7 + $0xc] sm:$0xf]
    %v2185 = vld [vmem:[%s7 + $0x10] sm:$0xf]
    %v2186 = vld [vmem:[%s7 + $0x14] sm:$0xf]
    %v2187 = vld [vmem:[%s7 + $0x18] sm:$0xf]
    %v2188 = vld [vmem:[%s7 + $0x1c] sm:$0xf]
    %v2189 = vld [vmem:[%s7 + $0x20] sm:$0xf]
    %v2190 = vld [vmem:[%s7 + $0x24] sm:$0xf]
    %v2191 = vld [vmem:[%s7 + $0x28] sm:$0xf]
    %v2192 = vld [vmem:[%s7 + $0x2c] sm:$0xf]
    %v2193 = vld [vmem:[%s8] sm:$0x1]
    %v2195 = vlaneseq
    %v2196 = vshrl.u32 %v2195, 7
    %v2197 = vsub.s32 0, %v2196
    %v2198 = vrot.slane %v2193, %v2197
    %v2212 = vunpack.c.l.b16 %v2181
    %v2213 = vunpack.c.l.b16 %v2182
    %v2214 = vunpack.c.l.b16 %v2183
    %v2215 = vunpack.c.l.b16 %v2184
    %v2216 = vunpack.c.l.b16 %v2185
    %v2217 = vunpack.c.l.b16 %v2186
    %v2218 = vunpack.c.l.b16 %v2187
    %v2219 = vunpack.c.l.b16 %v2188
    %v2220 = vunpack.c.l.b16 %v2189
    %v2221 = vunpack.c.l.b16 %v2190
    %v2222 = vunpack.c.l.b16 %v2191
    %v2223 = vunpack.c.l.b16 %v2192
    %v2224 = vpack.c.b16 %v2213, %v2212
    %v2225 = vpack.c.b16 %v2215, %v2214
    %v2226 = vpack.c.b16 %v2217, %v2216
    %v2227 = vpack.c.b16 %v2219, %v2218
    %v2228 = vpack.c.b16 %v2221, %v2220
    %v2229 = vpack.c.b16 %v2223, %v2222
    %v2237 = vsel %vm860, %v2175, 0
    %v2240 = vsel %vm860, %v2176, 0
    %v2243 = vsel %vm860, %v2177, 0
    %v2246 = vsel %vm860, %v2178, 0
    %v2249 = vsel %vm860, %v2179, 0
    %v2252 = vsel %vm860, %v2180, 0
    %2254 = vmatprep.subr.bf16.mxu0 0
    %2255 = vmatpush1.bf16.msra.mxu0 0
    %2256 = vmatprep.subr.bf16.mxu0 0
    %2257 = vmatpush1.bf16.msra.mxu0 0
    %2258 = vmatprep.subr.bf16.mxu0 0
    %2259 = vmatpush1.bf16.msra.mxu0 %v2229
    %2260 = vmatprep.subr.bf16.mxu0 0
    %2261 = vmatpush1.bf16.msra.mxu0 %v2228
    %2262 = vmatprep.subr.bf16.mxu0 0
    %2263 = vmatpush1.bf16.msra.mxu0 %v2227
    %2264 = vmatprep.subr.bf16.mxu0 0
    %2265 = vmatpush1.bf16.msra.mxu0 %v2226
    %2266 = vmatprep.subr.bf16.mxu0 0
    %2267 = vmatpush1.bf16.msra.mxu0 %v2225
    %2268 = vmatprep.subr.bf16.mxu0 0
    %2269 = vmatpush1.bf16.msra.mxu0 %v2224
    %2270 = vmatprep.subr.bf16.mxu0 0
    %2271 = vmatpush2.bf16.msra.mxu0 0
    %2272 = vmatprep.subr.bf16.mxu0 0
    %2273 = vmatpush2.bf16.msra.mxu0 0
    %2274 = vmatprep.subr.bf16.mxu0 0
    %2275 = vmatpush2.bf16.msra.mxu0 0
    %2276 = vmatprep.subr.bf16.mxu0 0
    %2277 = vmatpush2.bf16.msra.mxu0 0
    %2278 = vmatprep.subr.bf16.mxu0 0
    %2279 = vmatpush2.bf16.msra.mxu0 0
    %2280 = vmatprep.subr.bf16.mxu0 0
    %2281 = vmatpush2.bf16.msra.mxu0 0
    %2282 = vmatprep.subr.bf16.mxu0 0
    %2283 = vmatpush2.bf16.msra.mxu0 0
    %2284 = vmatprep.subr.bf16.mxu0 0
    %2285 = vmatpush2.bf16.msra.mxu0 0
    %2286 = vmatprep.mubr.bf16.mxu0 0
    %2287 = vmatmul.mubr.bf16.gmra.mxu0 %v2237
    %v2288 = vpop.f32.mrf.mxu0
    %v2289 = vadd.f32 %v2198, %v2288
    %v2290 = vpop.f32.mrf.mxu0
    %v2291 = vpop.f32.mrf.mxu0
    %v2292 = vadd.f32 %v2198, %v2291
    %v2293 = vpop.f32.mrf.mxu0
    %2294 = vmatprep.mubr.bf16.mxu0 0
    %2295 = vmatmul.mubr.bf16.gmra.mxu0 %v2240
    %v2296 = vpop.f32.mrf.mxu0
    %v2297 = vadd.f32 %v2198, %v2296
    %v2298 = vpop.f32.mrf.mxu0
    %v2299 = vpop.f32.mrf.mxu0
    %v2300 = vadd.f32 %v2198, %v2299
    %v2301 = vpop.f32.mrf.mxu0
    %2302 = vmatprep.mubr.bf16.mxu0 0
    %2303 = vmatmul.mubr.bf16.gmra.mxu0 %v2243
    %v2304 = vpop.f32.mrf.mxu0
    %v2305 = vadd.f32 %v2198, %v2304
    %v2306 = vpop.f32.mrf.mxu0
    %v2307 = vpop.f32.mrf.mxu0
    %v2308 = vadd.f32 %v2198, %v2307
    %v2309 = vpop.f32.mrf.mxu0
    %2310 = vmatprep.mubr.bf16.mxu0 0
    %2311 = vmatmul.mubr.bf16.gmra.mxu0 %v2246
    %v2312 = vpop.f32.mrf.mxu0
    %v2313 = vadd.f32 %v2198, %v2312
    %v2314 = vpop.f32.mrf.mxu0
    %v2315 = vpop.f32.mrf.mxu0
    %v2316 = vadd.f32 %v2198, %v2315
    %v2317 = vpop.f32.mrf.mxu0
    %2318 = vmatprep.mubr.bf16.mxu0 0
    %2319 = vmatmul.mubr.bf16.gmra.mxu0 %v2249
    %v2320 = vpop.f32.mrf.mxu0
    %v2321 = vadd.f32 %v2198, %v2320
    %v2322 = vpop.f32.mrf.mxu0
    %v2323 = vpop.f32.mrf.mxu0
    %v2324 = vadd.f32 %v2198, %v2323
    %v2325 = vpop.f32.mrf.mxu0
    %2326 = vmatprep.mubr.bf16.mxu0 0
    %2327 = vmatmul.mubr.bf16.gmra.mxu0 %v2252
    %v2328 = vpop.f32.mrf.mxu0
    %v2329 = vadd.f32 %v2198, %v2328
    %v2330 = vpop.f32.mrf.mxu0
    %v2331 = vpop.f32.mrf.mxu0
    %v2332 = vadd.f32 %v2198, %v2331
    %v2333 = vpop.f32.mrf.mxu0
    %2334 = vdwg.mxu0
    %v2335 = vmul.f32 %v2289, 0.2
    %v2336 = vmul.f32 %v2292, 0.2
    %v2337 = vmul.f32 %v2297, 0.2
    %v2338 = vmul.f32 %v2300, 0.2
    %v2339 = vmul.f32 %v2305, 0.2
    %v2340 = vmul.f32 %v2308, 0.2
    %v2341 = vmul.f32 %v2313, 0.2
    %v2342 = vmul.f32 %v2316, 0.2
    %v2343 = vmul.f32 %v2321, 0.2
    %v2344 = vmul.f32 %v2324, 0.2
    %v2345 = vmul.f32 %v2329, 0.2
    %v2346 = vmul.f32 %v2332, 0.2
    %v2347 = vmax.f32 %v2289, %v2335
    %v2348 = vmax.f32 %v2292, %v2336
    %v2349 = vmax.f32 %v2297, %v2337
    %v2350 = vmax.f32 %v2300, %v2338
    %v2351 = vmax.f32 %v2305, %v2339
    %v2352 = vmax.f32 %v2308, %v2340
    %v2353 = vmax.f32 %v2313, %v2341
    %v2354 = vmax.f32 %v2316, %v2342
    %v2355 = vmax.f32 %v2321, %v2343
    %v2356 = vmax.f32 %v2324, %v2344
    %v2357 = vmax.f32 %v2329, %v2345
    %v2358 = vmax.f32 %v2332, %v2346
    %v2359 = vld [vmem:[%s9] sm:$0x1]
    %v2361 = vlaneseq
    %v2362 = vshrl.u32 %v2361, 7
    %v2363 = vsub.s32 0, %v2362
    %v2364 = vrot.slane %v2359, %v2363
    %v2366 = vmul.f32 %v2347, %v2364
    %v2367 = vmul.f32 %v2348, %v2364
    %v2368 = vmul.f32 %v2349, %v2364
    %v2369 = vmul.f32 %v2350, %v2364
    %v2370 = vmul.f32 %v2351, %v2364
    %v2371 = vmul.f32 %v2352, %v2364
    %v2372 = vmul.f32 %v2353, %v2364
    %v2373 = vmul.f32 %v2354, %v2364
    %v2374 = vmul.f32 %v2355, %v2364
    %v2375 = vmul.f32 %v2356, %v2364
    %v2376 = vmul.f32 %v2357, %v2364
    %v2377 = vmul.f32 %v2358, %v2364
    %v2378 = vsel %vm716, %v2366, 0.0
    %2379 = vadd.xlane.f32.xlu0 %v2378
    %v2380 = vpop.xlane.xlu0 %2379
    %v2381 = vsel %vm716, %v2367, 0.0
    %2382 = vadd.xlane.f32.xlu0 %v2381
    %v2383 = vpop.xlane.xlu0 %2382
    %v2384 = vsel %vm716, %v2368, 0.0
    %2385 = vadd.xlane.f32.xlu0 %v2384
    %v2386 = vpop.xlane.xlu0 %2385
    %v2387 = vsel %vm716, %v2369, 0.0
    %2388 = vadd.xlane.f32.xlu0 %v2387
    %v2389 = vpop.xlane.xlu0 %2388
    %v2390 = vsel %vm716, %v2370, 0.0
    %2391 = vadd.xlane.f32.xlu0 %v2390
    %v2392 = vpop.xlane.xlu0 %2391
    %v2393 = vsel %vm716, %v2371, 0.0
    %2394 = vadd.xlane.f32.xlu0 %v2393
    %v2395 = vpop.xlane.xlu0 %2394
    %v2396 = vsel %vm716, %v2372, 0.0
    %2397 = vadd.xlane.f32.xlu0 %v2396
    %v2398 = vpop.xlane.xlu0 %2397
    %v2399 = vsel %vm716, %v2373, 0.0
    %2400 = vadd.xlane.f32.xlu0 %v2399
    %v2401 = vpop.xlane.xlu0 %2400
    %v2402 = vsel %vm716, %v2374, 0.0
    %2403 = vadd.xlane.f32.xlu0 %v2402
    %v2404 = vpop.xlane.xlu0 %2403
    %v2405 = vsel %vm716, %v2375, 0.0
    %2406 = vadd.xlane.f32.xlu0 %v2405
    %v2407 = vpop.xlane.xlu0 %2406
    %v2408 = vsel %vm716, %v2376, 0.0
    %2409 = vadd.xlane.f32.xlu0 %v2408
    %v2410 = vpop.xlane.xlu0 %2409
    %v2411 = vsel %vm716, %v2377, 0.0
    %2412 = vadd.xlane.f32.xlu0 %v2411
    %v2413 = vpop.xlane.xlu0 %2412
    %v2414 = vld [vmem:[#allocation5] sm:$0x1]
    %v2416 = vlaneseq
    %v2417 = vshrl.u32 %v2416, 7
    %v2418 = vsub.s32 0, %v2417
    %v2419 = vrot.slane %v2414, %v2418
    %2420 = vset.pattern.permute.xlu0 0
    %2421 = vperm.xlu0 %2420, %v2419
    %v2422 = vpop.permute.xlu0 %2421
    %v2424 = vadd.f32 %v2380, %v2422
    %v2425 = vadd.f32 %v2383, %v2422
    %v2426 = vadd.f32 %v2386, %v2422
    %v2427 = vadd.f32 %v2389, %v2422
    %v2428 = vadd.f32 %v2392, %v2422
    %v2429 = vadd.f32 %v2395, %v2422
    %v2430 = vadd.f32 %v2398, %v2422
    %v2431 = vadd.f32 %v2401, %v2422
    %v2432 = vadd.f32 %v2404, %v2422
    %v2433 = vadd.f32 %v2407, %v2422
    %v2434 = vadd.f32 %v2410, %v2422
    %v2435 = vadd.f32 %v2413, %v2422
    %v2448 = vlaneseq
    %v2449 = vand.u32 %v2448, 127
    %v2450 = vlaneseq
    %v2451 = vshrl.u32 %v2450, 7
    %v2452 = vsub.s32 %v2449, %v2451
    %v2453 = vrot.slane %v2424, %v2452
    %v2454 = vadd.s32 %v2449, 4294967288
    %v2455 = vlaneseq
    %v2456 = vshrl.u32 %v2455, 7
    %v2457 = vsub.s32 %v2454, %v2456
    %v2458 = vrot.slane %v2425, %v2457
    %vm2459 = vcmask 130112
    %v2460 = vsel %vm2459, %v2458, %v2453
    %v2461 = vadd.s32 %v2449, 4294967280
    %v2462 = vlaneseq
    %v2463 = vshrl.u32 %v2462, 7
    %v2464 = vsub.s32 %v2461, %v2463
    %v2465 = vrot.slane %v2426, %v2464
    %vm2466 = vcmask 195712
    %v2467 = vsel %vm2466, %v2465, %v2460
    %v2468 = vadd.s32 %v2449, 4294967272
    %v2469 = vlaneseq
    %v2470 = vshrl.u32 %v2469, 7
    %v2471 = vsub.s32 %v2468, %v2470
    %v2472 = vrot.slane %v2427, %v2471
    %vm2473 = vcmask 261312
    %v2474 = vsel %vm2473, %v2472, %v2467
    %v2475 = vadd.s32 %v2449, 4294967264
    %v2476 = vlaneseq
    %v2477 = vshrl.u32 %v2476, 7
    %v2478 = vsub.s32 %v2475, %v2477
    %v2479 = vrot.slane %v2428, %v2478
    %vm2480 = vcmask 326912
    %v2481 = vsel %vm2480, %v2479, %v2474
    %v2482 = vadd.s32 %v2449, 4294967256
    %v2483 = vlaneseq
    %v2484 = vshrl.u32 %v2483, 7
    %v2485 = vsub.s32 %v2482, %v2484
    %v2486 = vrot.slane %v2429, %v2485
    %vm2487 = vcmask 392512
    %v2488 = vsel %vm2487, %v2486, %v2481
    %v2489 = vlaneseq
    %v2490 = vshrl.u32 %v2489, 7
    %v2491 = vsub.s32 %v2449, %v2490
    %v2492 = vrot.slane %v2430, %v2491
    %v2493 = vlaneseq
    %v2494 = vshrl.u32 %v2493, 7
    %v2495 = vsub.s32 %v2454, %v2494
    %v2496 = vrot.slane %v2431, %v2495
    %v2497 = vsel %vm2459, %v2496, %v2492
    %v2498 = vlaneseq
    %v2499 = vshrl.u32 %v2498, 7
    %v2500 = vsub.s32 %v2461, %v2499
    %v2501 = vrot.slane %v2432, %v2500
    %v2502 = vsel %vm2466, %v2501, %v2497
    %v2503 = vlaneseq
    %v2504 = vshrl.u32 %v2503, 7
    %v2505 = vsub.s32 %v2468, %v2504
    %v2506 = vrot.slane %v2433, %v2505
    %v2507 = vsel %vm2473, %v2506, %v2502
    %v2508 = vlaneseq
    %v2509 = vshrl.u32 %v2508, 7
    %v2510 = vsub.s32 %v2475, %v2509
    %v2511 = vrot.slane %v2434, %v2510
    %v2512 = vsel %vm2480, %v2511, %v2507
    %v2513 = vlaneseq
    %v2514 = vshrl.u32 %v2513, 7
    %v2515 = vsub.s32 %v2482, %v2514
    %v2516 = vrot.slane %v2435, %v2515
    %v2517 = vsel %vm2487, %v2516, %v2512
    %vm2518 = vcmask 1041409
    %v2519 = vsel %vm2518, %v2517, %v2488
    %vm2521 = vcmask 386048
    %2522 = vst.msk [vmem:[#allocation9] sm:$0x3] %vm2521, %v2519
    // Predicated region
    $region50: #{generator_forward.1} parent=1 // pred_check
      _
    $region51: #{generator_forward.1} parent=1 // pred_check_branch
      %2524 = sbr.rel (0) target = $region53
    $region52: #{generator_forward.1} parent=1 // pred_region
      %s2526 = ssub.s32 32, 32
      %2527 = vsyncadd [#allocation8], %s2526
      %s2529 = sshll.u32 [#allocation9], 4
      %s2530 = int_to_ptr.vmem [resolvable:$true] %s2529
      %2532 = dma.vmem_to_hbm [thread:$0]  %s2530, 32, %s11, [#allocation8]
    $region53: #{generator_forward.1} parent=1 // pred_fallthru
      _
    // Predicated region
    $region54: #{generator_forward.1} parent=1 // pred_check
      _
    $region55: #{generator_forward.1} parent=1 // pred_check_branch
      %2534 = sbr.rel (0) target = $region57
    $region56: #{generator_forward.1} parent=1 // pred_region
      %2535 = dma.done [#allocation8], 32
    $region57: #{generator_forward.1} parent=1 // pred_fallthru
      _
    %2536 = vsyncpa [#allocation7], 1
    %2537 = vsyncpa [#allocation8], 1

</llo_original>
